<compile_context>
chip_gen: v7x
topology: tpu7x:2x2x1
jax: 0.10.0
libtpu: 0.0.40
codegen_flags: <defaults>
</compile_context>

<pallas_src>
import functools

import jax
import jax.numpy as jnp
from jax.experimental import pallas as pl
from jax.experimental.pallas import tpu as pltpu

# ---- "const" values (module defaults) ----
BIDIRECTIONAL = 1
DECODER_LAYERS = 1
LSTM_DECODER_DROPOUT = 0.0   # single layer -> dropout is a no-op in forward
SOS_TOKEN = 1
PAD_TOKEN = 0


def _round_up(x, m):
    return (x + m - 1) // m * m


def _decoder_kernel(h0_ref, wcomb_ref, bcomb_ref, wout_ref, bout_ref,
                    out_ref, hout_ref, cout_ref,
                    h_s, c_s, tok_s, *, Hp, Vp, T, T_chunk):
    chunk = pl.program_id(0)
    B = h_s.shape[0]
    iota_v = jax.lax.broadcasted_iota(jnp.int32, (B, Vp), 1)

    @pl.when(chunk == 0)
    def _init():
        h_s[...] = h0_ref[...]
        c_s[...] = jnp.zeros_like(c_s)
        tok_s[...] = (iota_v == SOS_TOKEN).astype(jnp.float32)

    base = chunk * T_chunk

    def step(i, carry):
        h, c, onehot = carry

        # Single fused gate matmul on the MXU:
        #   gates = [onehot | h] @ [relu(E) W_ih^T ; W_hh^T] + (b_ih + b_hh)
        xh = jnp.concatenate([onehot, h], axis=-1)                 # (B, Vp+Hp)
        gates = jnp.dot(xh, wcomb_ref[...],
                        preferred_element_type=jnp.float32) + bcomb_ref[...]
        i_g = jax.nn.sigmoid(gates[:, 0 * Hp:1 * Hp])
        f_g = jax.nn.sigmoid(gates[:, 1 * Hp:2 * Hp])
        g_g = jnp.tanh(gates[:, 2 * Hp:3 * Hp])
        o_g = jax.nn.sigmoid(gates[:, 3 * Hp:4 * Hp])
        c_new = f_g * c + i_g * g_g
        h_new = o_g * jnp.tanh(c_new)

        # Output projection + LogSoftmax. Pad vocab columns carry a -1e30 bias
        # so they contribute exp(..)=0 to the sum and never win the argmax.
        logits = jnp.dot(h_new, wout_ref[...],
                         preferred_element_type=jnp.float32) + bout_ref[...]
        m = jnp.max(logits, axis=-1, keepdims=True)
        lse = m + jnp.log(jnp.sum(jnp.exp(logits - m), axis=-1, keepdims=True))
        out_ref[i] = (logits - lse).astype(out_ref.dtype)

        # Greedy feedback: argmax from logits reusing m (first-max tie break,
        # matching torch.topk) -> one-hot token for the next step.
        idx = jnp.min(jnp.where(logits == m, iota_v, Vp), axis=-1, keepdims=True)
        onehot_new = (iota_v == idx).astype(jnp.float32)

        # Time-padding guard: steps beyond T-1 must not advance the state.
        valid = (base + i) < T
        h = jnp.where(valid, h_new, h)
        c = jnp.where(valid, c_new, c)
        return h, c, onehot_new

    h, c, tok = jax.lax.fori_loop(
        0, T_chunk, step, (h_s[...], c_s[...], tok_s[...]), unroll=True)
    h_s[...] = h
    c_s[...] = c
    tok_s[...] = tok

    # Final-state stores only on the last chunk (saves per-step vector stores).
    @pl.when(chunk == pl.num_programs(0) - 1)
    def _finalize():
        hout_ref[...] = h
        cout_ref[...] = c


def _split_gates_and_pad(w, H, Hp):
    """(in_dim, 4H) with PyTorch [i,f,g,o] gate columns -> (in_dim, 4*Hp).

    Each gate block is padded to Hp lanes so in-kernel gate slices at
    multiples of Hp are lane-tile aligned. Pad columns are zero -> pad gate
    activations are sigmoid(0)/tanh(0), which keep pad h/c lanes at exactly 0.
    """
    blocks = []
    for k in range(4):
        blk = w[:, k * H:(k + 1) * H]
        blocks.append(jnp.pad(blk, ((0, 0), (0, Hp - H))))
    return jnp.concatenate(blocks, axis=1)


def decoder_rnn_greedy_forward(encoder_hidden, target_length, params, *,
                               t_chunk=8):
    """encoder_hidden: (1, B, H) f32; target_length: static Python int."""
    emb, w_ih, w_hh, b_ih, b_hh, w_out, b_out = params
    V, H = emb.shape
    B = encoder_hidden.shape[1]
    T = int(target_length)            # must be a static Python int

    Bp = _round_up(B, 8)
    Hp = _round_up(H, 128)
    Vp = _round_up(V, 128)
    T_chunk = max(1, min(int(t_chunk), T))
    n_chunks = -(-T // T_chunk)
    Tp = n_chunks * T_chunk

    f32 = jnp.float32
    # Fold embedding + ReLU + W_ih into one table, then fuse with W_hh^T so the
    # LSTM gates are a single [onehot | h] @ (Vp+Hp, 4Hp) matmul.
    G = jnp.dot(jnp.maximum(emb.astype(f32), 0.0), w_ih.astype(f32).T)  # (V,4H)
    w_comb = jnp.zeros((Vp + Hp, 4 * Hp), f32)
    w_comb = w_comb.at[:V].set(_split_gates_and_pad(G, H, Hp))
    w_comb = w_comb.at[Vp:Vp + H].set(
        _split_gates_and_pad(w_hh.astype(f32).T, H, Hp))
    b_comb = _split_gates_and_pad(
        (b_ih + b_hh).astype(f32).reshape(1, 4 * H), H, Hp)            # (1,4Hp)

    wout_p = jnp.zeros((Hp, Vp), f32).at[:H, :V].set(w_out.astype(f32).T)
    bout_p = jnp.full((1, Vp), -1e30, f32).at[0, :V].set(b_out.astype(f32))
    h0_p = jnp.zeros((Bp, Hp), f32).at[:B, :H].set(encoder_hidden[0].astype(f32))

    kernel = functools.partial(_decoder_kernel, Hp=Hp, Vp=Vp, T=T,
                               T_chunk=T_chunk)
    const = lambda shape: pl.BlockSpec(shape, lambda c: (0,) * len(shape))

    grid_spec = pltpu.PrefetchScalarGridSpec(
        num_scalar_prefetch=0,
        grid=(n_chunks,),
        in_specs=[
            const((Bp, Hp)),            # h0
            const((Vp + Hp, 4 * Hp)),   # fused gate weights [G ; W_hh^T]
            const((1, 4 * Hp)),         # fused gate bias
            const((Hp, Vp)),            # W_out^T
            const((1, Vp)),             # b_out (pad lanes = -1e30)
        ],
        out_specs=[
            pl.BlockSpec((T_chunk, Bp, Vp), lambda c: (c, 0, 0)),  # log-probs
            pl.BlockSpec((Bp, Hp), lambda c: (0, 0)),              # final h
            pl.BlockSpec((Bp, Hp), lambda c: (0, 0)),              # final c
        ],
        scratch_shapes=[
            pltpu.VMEM((Bp, Hp), f32),   # h state (persists across chunks)
            pltpu.VMEM((Bp, Hp), f32),   # c state
            pltpu.VMEM((Bp, Vp), f32),   # current token (one-hot)
        ],
    )

    logp_pad, h_pad, c_pad = pl.pallas_call(
        kernel,
        out_shape=(
            jax.ShapeDtypeStruct((Tp, Bp, Vp), f32),
            jax.ShapeDtypeStruct((Bp, Hp), f32),
            jax.ShapeDtypeStruct((Bp, Hp), f32),
        ),
        grid_spec=grid_spec,
        compiler_params=pltpu.CompilerParams(
            dimension_semantics=("arbitrary",)),
    )(h0_p, w_comb, b_comb, wout_p, bout_p)

    # Glue: match PyTorch shapes — outputs (B, T, V), hidden (1, B, H) each.
    outputs = jnp.transpose(logp_pad[:T, :B, :V], (1, 0, 2))
    h_f = h_pad[:B, :H][None]
    c_f = c_pad[:B, :H][None]
    return outputs, (h_f, c_f)


def reference_forward(encoder_hidden, target_length, params):
    """Pure-JAX reference mirroring the PyTorch code, for verification."""
    emb, w_ih, w_hh, b_ih, b_hh, w_out, b_out = params
    H = emb.shape[1]
    B = encoder_hidden.shape[1]
    h = encoder_hidden[0]
    c = jnp.zeros((B, H), jnp.float32)
    tok = jnp.full((B,), SOS_TOKEN, jnp.int32)
    outs = []
    for _ in range(target_length):
        x = jnp.maximum(emb[tok], 0.0)
        gates = x @ w_ih.T + h @ w_hh.T + b_ih + b_hh
        i_g = jax.nn.sigmoid(gates[:, 0 * H:1 * H])
        f_g = jax.nn.sigmoid(gates[:, 1 * H:2 * H])
        g_g = jnp.tanh(gates[:, 2 * H:3 * H])
        o_g = jax.nn.sigmoid(gates[:, 3 * H:4 * H])
        c = f_g * c + i_g * g_g
        h = o_g * jnp.tanh(c)
        logits = h @ w_out.T + b_out
        logp = jax.nn.log_softmax(logits, axis=-1)
        outs.append(logp[:, None, :])
        tok = jnp.argmax(logp, axis=-1).astype(jnp.int32)
    return jnp.concatenate(outs, axis=1), (h[None], c[None])


def make_params(key, hidden_size, output_size):
    """Deterministic synthetic init matching the PyTorch module's shapes."""
    H, V = hidden_size, output_size
    ks = jax.random.split(key, 7)
    bound = 1.0 / jnp.sqrt(H)
    emb = jax.random.normal(ks[0], (V, H), jnp.float32)
    emb = emb.at[PAD_TOKEN].set(0.0)                                  # padding_idx
    w_ih = jax.random.uniform(ks[1], (4 * H, H), jnp.float32, -bound, bound)
    w_hh = jax.random.uniform(ks[2], (4 * H, H), jnp.float32, -bound, bound)
    b_ih = jax.random.uniform(ks[3], (4 * H,), jnp.float32, -bound, bound)
    b_hh = jax.random.uniform(ks[4], (4 * H,), jnp.float32, -bound, bound)
    w_out = jax.random.uniform(ks[5], (V, BIDIRECTIONAL * H), jnp.float32,
                               -bound, bound)
    b_out = jax.random.uniform(ks[6], (V,), jnp.float32, -bound, bound)
    return (emb, w_ih, w_hh, b_ih, b_hh, w_out, b_out)


if __name__ == "__main__":
    B, H, V, T = 4, 32, 16, 10   # batch, hidden_size, output_size, target_length

    key = jax.random.PRNGKey(0)
    k_param, k_h = jax.random.split(key)
    params = make_params(k_param, H, V)
    encoder_hidden = jax.random.normal(
        k_h, (BIDIRECTIONAL * DECODER_LAYERS, B, H), jnp.float32)

    # t_chunk=4 -> 3 grid chunks (last one time-padded): exercises both the
    # cross-chunk state carry and the time-padding guard.
    out, (h_f, c_f) = decoder_rnn_greedy_forward(encoder_hidden, T, params,
                                                 t_chunk=4)
    jax.block_until_ready((out, h_f, c_f))

    ref_out, (ref_h, ref_c) = reference_forward(encoder_hidden, T, params)
    assert out.shape == (B, T, V)
    assert h_f.shape == (1, B, H) and c_f.shape == (1, B, H)
    assert jnp.allclose(out, ref_out, atol=1e-4, rtol=1e-4)
    assert jnp.allclose(h_f, ref_h, atol=1e-4, rtol=1e-4)
    assert jnp.allclose(c_f, ref_c, atol=1e-4, rtol=1e-4)

    print("KERNEL_OK")
</pallas_src>

<mosaic_0001>
module attributes {stable_mosaic.version = 11 : i64} {
  func.func @_decoder_kernel(%arg0: i32, %arg1: memref<8x128xf32, #tpu.memory_space<vmem>>, %arg2: memref<256x512xf32, #tpu.memory_space<vmem>>, %arg3: memref<1x512xf32, #tpu.memory_space<vmem>>, %arg4: memref<128x128xf32, #tpu.memory_space<vmem>>, %arg5: memref<1x128xf32, #tpu.memory_space<vmem>>, %arg6: memref<4x8x128xf32, #tpu.memory_space<vmem>>, %arg7: memref<8x128xf32, #tpu.memory_space<vmem>>, %arg8: memref<8x128xf32, #tpu.memory_space<vmem>>, %arg9: memref<8x128xf32, #tpu.memory_space<vmem>>, %arg10: memref<8x128xf32, #tpu.memory_space<vmem>>, %arg11: memref<8x128xf32, #tpu.memory_space<vmem>>) attributes {dimension_semantics = [#tpu.dimension_semantics<arbitrary>], iteration_bounds = array<i64: 3>, scalar_prefetch = 0 : i64, scratch_operands = 3 : i64, tpu.core_type = #tpu.core_type<tc>, window_params = [{pipeline_mode = #tpu.pipeline_mode<synchronous>, transform_indices = @transform_0, window_bounds = array<i64: 8, 128>}, {pipeline_mode = #tpu.pipeline_mode<synchronous>, transform_indices = @transform_1, window_bounds = array<i64: 256, 512>}, {pipeline_mode = #tpu.pipeline_mode<synchronous>, transform_indices = @transform_2, window_bounds = array<i64: 1, 512>}, {pipeline_mode = #tpu.pipeline_mode<synchronous>, transform_indices = @transform_3, window_bounds = array<i64: 128, 128>}, {pipeline_mode = #tpu.pipeline_mode<synchronous>, transform_indices = @transform_4, window_bounds = array<i64: 1, 128>}, {transform_indices = @transform_5, window_bounds = array<i64: 4, 8, 128>}, {pipeline_mode = #tpu.pipeline_mode<synchronous>, transform_indices = @transform_6, window_bounds = array<i64: 8, 128>}, {pipeline_mode = #tpu.pipeline_mode<synchronous>, transform_indices = @transform_7, window_bounds = array<i64: 8, 128>}]} {
    %0 = tpu.iota {dimensions = array<i32: 1>} : vector<8x128xi32>
    %c0_i32 = arith.constant 0 : i32
    %1 = arith.cmpi eq, %arg0, %c0_i32 : i32
    %2 = arith.extui %1 : i1 to i32
    %c0_i32_0 = arith.constant 0 : i32
    %3 = arith.cmpi ne, %2, %c0_i32_0 : i32
    scf.if %3 {
      %c0_93 = arith.constant 0 : index
      %c0_94 = arith.constant 0 : index
      %274 = vector.load %arg1[%c0_93, %c0_94] : memref<8x128xf32, #tpu.memory_space<vmem>>, vector<8x128xf32>
      %c0_95 = arith.constant 0 : index
      %c0_96 = arith.constant 0 : index
      %275 = vector.load %arg9[%c0_95, %c0_96] : memref<8x128xf32, #tpu.memory_space<vmem>>, vector<8x128xf32>
      tpu.vector_store %arg9[%c0_95, %c0_96], %274 {strides = array<i32>} : memref<8x128xf32, #tpu.memory_space<vmem>>, vector<8x128xf32>,
      %cst_97 = arith.constant 0.000000e+00 : f32
      %276 = vector.broadcast %cst_97 : f32 to vector<8x128xf32>
      %c0_98 = arith.constant 0 : index
      %c0_99 = arith.constant 0 : index
      %277 = vector.load %arg10[%c0_98, %c0_99] : memref<8x128xf32, #tpu.memory_space<vmem>>, vector<8x128xf32>
      tpu.vector_store %arg10[%c0_98, %c0_99], %276 {strides = array<i32>} : memref<8x128xf32, #tpu.memory_space<vmem>>, vector<8x128xf32>,
      %c1_i32_100 = arith.constant 1 : i32
      %278 = vector.broadcast %c1_i32_100 : i32 to vector<8x128xi32>
      %279 = arith.cmpi eq, %0, %278 : vector<8x128xi32>
      %280 = arith.extui %279 : vector<8x128xi1> to vector<8x128xi32>
      %281 = arith.sitofp %280 : vector<8x128xi32> to vector<8x128xf32>
      %c0_101 = arith.constant 0 : index
      %c0_102 = arith.constant 0 : index
      %282 = vector.load %arg11[%c0_101, %c0_102] : memref<8x128xf32, #tpu.memory_space<vmem>>, vector<8x128xf32>
      tpu.vector_store %arg11[%c0_101, %c0_102], %281 {strides = array<i32>} : memref<8x128xf32, #tpu.memory_space<vmem>>, vector<8x128xf32>,
    } else {
    }
    %c4_i32 = arith.constant 4 : i32
    %4 = arith.muli %arg0, %c4_i32 : i32
    %c0 = arith.constant 0 : index
    %c0_1 = arith.constant 0 : index
    %5 = vector.load %arg9[%c0, %c0_1] : memref<8x128xf32, #tpu.memory_space<vmem>>, vector<8x128xf32>
    %c0_2 = arith.constant 0 : index
    %c0_3 = arith.constant 0 : index
    %6 = vector.load %arg10[%c0_2, %c0_3] : memref<8x128xf32, #tpu.memory_space<vmem>>, vector<8x128xf32>
    %c0_4 = arith.constant 0 : index
    %c0_5 = arith.constant 0 : index
    %7 = vector.load %arg11[%c0_4, %c0_5] : memref<8x128xf32, #tpu.memory_space<vmem>>, vector<8x128xf32>
    %c0_i32_6 = arith.constant 0 : i32
    %8 = tpu.concatenate %7, %5 in 1 : vector<8x128xf32>, vector<8x128xf32> -> vector<8x256xf32>
    %c0_7 = arith.constant 0 : index
    %c0_8 = arith.constant 0 : index
    %9 = vector.load %arg2[%c0_7, %c0_8] : memref<256x512xf32, #tpu.memory_space<vmem>>, vector<256x512xf32>
    %cst = arith.constant dense<0.000000e+00> : vector<8x512xf32>
    %10 = tpu.matmul %8, %9, %cst {dimension_numbers = #tpu.dot_dimension_numbers<[1], [0], [0], [1], [0, 0, 1, 1], [], []>} : vector<8x256xf32>, vector<256x512xf32>, vector<8x512xf32> -> vector<8x512xf32>
    %c0_9 = arith.constant 0 : index
    %c0_10 = arith.constant 0 : index
    %11 = vector.load %arg3[%c0_9, %c0_10] : memref<1x512xf32, #tpu.memory_space<vmem>>, vector<1x512xf32>
    %12 = vector.broadcast %11 : vector<1x512xf32> to vector<8x512xf32>
    %13 = arith.addf %10, %12 : vector<8x512xf32>
    %14 = vector.extract_strided_slice %13 {offsets = [0, 0], sizes = [8, 128], strides = [1, 1]} : vector<8x512xf32> to vector<8x128xf32>
    %15 = arith.negf %14 : vector<8x128xf32>
    %16 = math.exp %15 : vector<8x128xf32>
    %cst_11 = arith.constant 1.000000e+00 : f32
    %17 = vector.broadcast %cst_11 : f32 to vector<8x128xf32>
    %18 = arith.addf %17, %16 : vector<8x128xf32>
    %19 = arith.divf %17, %18 : vector<8x128xf32>
    %20 = vector.extract_strided_slice %13 {offsets = [0, 128], sizes = [8, 128], strides = [1, 1]} : vector<8x512xf32> to vector<8x128xf32>
    %21 = arith.negf %20 : vector<8x128xf32>
    %22 = math.exp %21 : vector<8x128xf32>
    %cst_12 = arith.constant 1.000000e+00 : f32
    %23 = vector.broadcast %cst_12 : f32 to vector<8x128xf32>
    %24 = arith.addf %23, %22 : vector<8x128xf32>
    %25 = arith.divf %23, %24 : vector<8x128xf32>
    %26 = vector.extract_strided_slice %13 {offsets = [0, 256], sizes = [8, 128], strides = [1, 1]} : vector<8x512xf32> to vector<8x128xf32>
    %27 = math.tanh %26 : vector<8x128xf32>
    %28 = vector.extract_strided_slice %13 {offsets = [0, 384], sizes = [8, 128], strides = [1, 1]} : vector<8x512xf32> to vector<8x128xf32>
    %29 = arith.negf %28 : vector<8x128xf32>
    %30 = math.exp %29 : vector<8x128xf32>
    %cst_13 = arith.constant 1.000000e+00 : f32
    %31 = vector.broadcast %cst_13 : f32 to vector<8x128xf32>
    %32 = arith.addf %31, %30 : vector<8x128xf32>
    %33 = arith.divf %31, %32 : vector<8x128xf32>
    %34 = arith.mulf %25, %6 : vector<8x128xf32>
    %35 = arith.mulf %19, %27 : vector<8x128xf32>
    %36 = arith.addf %34, %35 : vector<8x128xf32>
    %37 = math.tanh %36 : vector<8x128xf32>
    %38 = arith.mulf %33, %37 : vector<8x128xf32>
    %c0_14 = arith.constant 0 : index
    %c0_15 = arith.constant 0 : index
    %39 = vector.load %arg4[%c0_14, %c0_15] : memref<128x128xf32, #tpu.memory_space<vmem>>, vector<128x128xf32>
    %cst_16 = arith.constant dense<0.000000e+00> : vector<8x128xf32>
    %40 = tpu.matmul %38, %39, %cst_16 {dimension_numbers = #tpu.dot_dimension_numbers<[1], [0], [0], [1], [0, 0, 1, 1], [], []>} : vector<8x128xf32>, vector<128x128xf32>, vector<8x128xf32> -> vector<8x128xf32>
    %c0_17 = arith.constant 0 : index
    %c0_18 = arith.constant 0 : index
    %41 = vector.load %arg5[%c0_17, %c0_18] : memref<1x128xf32, #tpu.memory_space<vmem>>, vector<1x128xf32>
    %42 = vector.broadcast %41 : vector<1x128xf32> to vector<8x128xf32>
    %43 = arith.addf %40, %42 : vector<8x128xf32>
    %cst_19 = arith.constant dense<0xFF800000> : vector<8xf32>
    %44 = vector.multi_reduction <maximumf>, %43, %cst_19 [1] : vector<8x128xf32> to vector<8xf32>
    %45 = vector.shape_cast %44 : vector<8xf32> to vector<8x1xf32>
    %46 = vector.broadcast %45 : vector<8x1xf32> to vector<8x128xf32>
    %47 = arith.subf %43, %46 : vector<8x128xf32>
    %48 = math.exp %47 : vector<8x128xf32>
    %cst_20 = arith.constant dense<0.000000e+00> : vector<8xf32>
    %49 = vector.multi_reduction <add>, %48, %cst_20 [1] : vector<8x128xf32> to vector<8xf32>
    %50 = vector.shape_cast %49 : vector<8xf32> to vector<8x1xf32>
    %51 = math.log %50 : vector<8x1xf32>
    %52 = arith.addf %45, %51 : vector<8x1xf32>
    %53 = vector.broadcast %52 : vector<8x1xf32> to vector<8x128xf32>
    %54 = arith.subf %43, %53 : vector<8x128xf32>
    %55 = arith.index_cast %c0_i32_6 : i32 to index
    %c0_21 = arith.constant 0 : index
    %c0_22 = arith.constant 0 : index
    %56 = vector.load %arg6[%55, %c0_21, %c0_22] : memref<4x8x128xf32, #tpu.memory_space<vmem>>, vector<1x8x128xf32>
    %57 = vector.shape_cast %56 : vector<1x8x128xf32> to vector<8x128xf32>
    %58 = vector.shape_cast %54 : vector<8x128xf32> to vector<1x8x128xf32>
    tpu.vector_store %arg6[%55, %c0_21, %c0_22], %58 {strides = array<i32>} : memref<4x8x128xf32, #tpu.memory_space<vmem>>, vector<1x8x128xf32>,
    %59 = vector.broadcast %45 : vector<8x1xf32> to vector<8x128xf32>
    %60 = arith.cmpf oeq, %43, %59 : vector<8x128xf32>
    %c128_i32 = arith.constant 128 : i32
    %61 = vector.broadcast %c128_i32 : i32 to vector<8x128xi32>
    %62 = arith.select %60, %0, %61 : vector<8x128xi1>, vector<8x128xi32>
    %cst_23 = arith.constant dense<2147483647> : vector<8xi32>
    %63 = vector.multi_reduction <minsi>, %62, %cst_23 [1] : vector<8x128xi32> to vector<8xi32>
    %64 = vector.shape_cast %63 : vector<8xi32> to vector<8x1xi32>
    %65 = vector.broadcast %64 : vector<8x1xi32> to vector<8x128xi32>
    %66 = arith.cmpi eq, %0, %65 : vector<8x128xi32>
    %67 = arith.extui %66 : vector<8x128xi1> to vector<8x128xi32>
    %68 = arith.sitofp %67 : vector<8x128xi32> to vector<8x128xf32>
    %69 = arith.addi %4, %c0_i32_6 : i32
    %c10_i32 = arith.constant 10 : i32
    %70 = arith.cmpi slt, %69, %c10_i32 : i32
    %71 = arith.select %70, %38, %5 : vector<8x128xf32>
    %72 = arith.select %70, %36, %6 : vector<8x128xf32>
    %c1_i32 = arith.constant 1 : i32
    %73 = tpu.concatenate %68, %71 in 1 : vector<8x128xf32>, vector<8x128xf32> -> vector<8x256xf32>
    %c0_24 = arith.constant 0 : index
    %c0_25 = arith.constant 0 : index
    %74 = vector.load %arg2[%c0_24, %c0_25] : memref<256x512xf32, #tpu.memory_space<vmem>>, vector<256x512xf32>
    %cst_26 = arith.constant dense<0.000000e+00> : vector<8x512xf32>
    %75 = tpu.matmul %73, %74, %cst_26 {dimension_numbers = #tpu.dot_dimension_numbers<[1], [0], [0], [1], [0, 0, 1, 1], [], []>} : vector<8x256xf32>, vector<256x512xf32>, vector<8x512xf32> -> vector<8x512xf32>
    %c0_27 = arith.constant 0 : index
    %c0_28 = arith.constant 0 : index
    %76 = vector.load %arg3[%c0_27, %c0_28] : memref<1x512xf32, #tpu.memory_space<vmem>>, vector<1x512xf32>
    %77 = vector.broadcast %76 : vector<1x512xf32> to vector<8x512xf32>
    %78 = arith.addf %75, %77 : vector<8x512xf32>
    %79 = vector.extract_strided_slice %78 {offsets = [0, 0], sizes = [8, 128], strides = [1, 1]} : vector<8x512xf32> to vector<8x128xf32>
    %80 = arith.negf %79 : vector<8x128xf32>
    %81 = math.exp %80 : vector<8x128xf32>
    %cst_29 = arith.constant 1.000000e+00 : f32
    %82 = vector.broadcast %cst_29 : f32 to vector<8x128xf32>
    %83 = arith.addf %82, %81 : vector<8x128xf32>
    %84 = arith.divf %82, %83 : vector<8x128xf32>
    %85 = vector.extract_strided_slice %78 {offsets = [0, 128], sizes = [8, 128], strides = [1, 1]} : vector<8x512xf32> to vector<8x128xf32>
    %86 = arith.negf %85 : vector<8x128xf32>
    %87 = math.exp %86 : vector<8x128xf32>
    %cst_30 = arith.constant 1.000000e+00 : f32
    %88 = vector.broadcast %cst_30 : f32 to vector<8x128xf32>
    %89 = arith.addf %88, %87 : vector<8x128xf32>
    %90 = arith.divf %88, %89 : vector<8x128xf32>
    %91 = vector.extract_strided_slice %78 {offsets = [0, 256], sizes = [8, 128], strides = [1, 1]} : vector<8x512xf32> to vector<8x128xf32>
    %92 = math.tanh %91 : vector<8x128xf32>
    %93 = vector.extract_strided_slice %78 {offsets = [0, 384], sizes = [8, 128], strides = [1, 1]} : vector<8x512xf32> to vector<8x128xf32>
    %94 = arith.negf %93 : vector<8x128xf32>
    %95 = math.exp %94 : vector<8x128xf32>
    %cst_31 = arith.constant 1.000000e+00 : f32
    %96 = vector.broadcast %cst_31 : f32 to vector<8x128xf32>
    %97 = arith.addf %96, %95 : vector<8x128xf32>
    %98 = arith.divf %96, %97 : vector<8x128xf32>
    %99 = arith.mulf %90, %72 : vector<8x128xf32>
    %100 = arith.mulf %84, %92 : vector<8x128xf32>
    %101 = arith.addf %99, %100 : vector<8x128xf32>
    %102 = math.tanh %101 : vector<8x128xf32>
    %103 = arith.mulf %98, %102 : vector<8x128xf32>
    %c0_32 = arith.constant 0 : index
    %c0_33 = arith.constant 0 : index
    %104 = vector.load %arg4[%c0_32, %c0_33] : memref<128x128xf32, #tpu.memory_space<vmem>>, vector<128x128xf32>
    %cst_34 = arith.constant dense<0.000000e+00> : vector<8x128xf32>
    %105 = tpu.matmul %103, %104, %cst_34 {dimension_numbers = #tpu.dot_dimension_numbers<[1], [0], [0], [1], [0, 0, 1, 1], [], []>} : vector<8x128xf32>, vector<128x128xf32>, vector<8x128xf32> -> vector<8x128xf32>
    %c0_35 = arith.constant 0 : index
    %c0_36 = arith.constant 0 : index
    %106 = vector.load %arg5[%c0_35, %c0_36] : memref<1x128xf32, #tpu.memory_space<vmem>>, vector<1x128xf32>
    %107 = vector.broadcast %106 : vector<1x128xf32> to vector<8x128xf32>
    %108 = arith.addf %105, %107 : vector<8x128xf32>
    %cst_37 = arith.constant dense<0xFF800000> : vector<8xf32>
    %109 = vector.multi_reduction <maximumf>, %108, %cst_37 [1] : vector<8x128xf32> to vector<8xf32>
    %110 = vector.shape_cast %109 : vector<8xf32> to vector<8x1xf32>
    %111 = vector.broadcast %110 : vector<8x1xf32> to vector<8x128xf32>
    %112 = arith.subf %108, %111 : vector<8x128xf32>
    %113 = math.exp %112 : vector<8x128xf32>
    %cst_38 = arith.constant dense<0.000000e+00> : vector<8xf32>
    %114 = vector.multi_reduction <add>, %113, %cst_38 [1] : vector<8x128xf32> to vector<8xf32>
    %115 = vector.shape_cast %114 : vector<8xf32> to vector<8x1xf32>
    %116 = math.log %115 : vector<8x1xf32>
    %117 = arith.addf %110, %116 : vector<8x1xf32>
    %118 = vector.broadcast %117 : vector<8x1xf32> to vector<8x128xf32>
    %119 = arith.subf %108, %118 : vector<8x128xf32>
    %120 = arith.index_cast %c1_i32 : i32 to index
    %c0_39 = arith.constant 0 : index
    %c0_40 = arith.constant 0 : index
    %121 = vector.load %arg6[%120, %c0_39, %c0_40] : memref<4x8x128xf32, #tpu.memory_space<vmem>>, vector<1x8x128xf32>
    %122 = vector.shape_cast %121 : vector<1x8x128xf32> to vector<8x128xf32>
    %123 = vector.shape_cast %119 : vector<8x128xf32> to vector<1x8x128xf32>
    tpu.vector_store %arg6[%120, %c0_39, %c0_40], %123 {strides = array<i32>} : memref<4x8x128xf32, #tpu.memory_space<vmem>>, vector<1x8x128xf32>,
    %124 = vector.broadcast %110 : vector<8x1xf32> to vector<8x128xf32>
    %125 = arith.cmpf oeq, %108, %124 : vector<8x128xf32>
    %c128_i32_41 = arith.constant 128 : i32
    %126 = vector.broadcast %c128_i32_41 : i32 to vector<8x128xi32>
    %127 = arith.select %125, %0, %126 : vector<8x128xi1>, vector<8x128xi32>
    %cst_42 = arith.constant dense<2147483647> : vector<8xi32>
    %128 = vector.multi_reduction <minsi>, %127, %cst_42 [1] : vector<8x128xi32> to vector<8xi32>
    %129 = vector.shape_cast %128 : vector<8xi32> to vector<8x1xi32>
    %130 = vector.broadcast %129 : vector<8x1xi32> to vector<8x128xi32>
    %131 = arith.cmpi eq, %0, %130 : vector<8x128xi32>
    %132 = arith.extui %131 : vector<8x128xi1> to vector<8x128xi32>
    %133 = arith.sitofp %132 : vector<8x128xi32> to vector<8x128xf32>
    %134 = arith.addi %4, %c1_i32 : i32
    %c10_i32_43 = arith.constant 10 : i32
    %135 = arith.cmpi slt, %134, %c10_i32_43 : i32
    %136 = arith.select %135, %103, %71 : vector<8x128xf32>
    %137 = arith.select %135, %101, %72 : vector<8x128xf32>
    %c2_i32 = arith.constant 2 : i32
    %138 = tpu.concatenate %133, %136 in 1 : vector<8x128xf32>, vector<8x128xf32> -> vector<8x256xf32>
    %c0_44 = arith.constant 0 : index
    %c0_45 = arith.constant 0 : index
    %139 = vector.load %arg2[%c0_44, %c0_45] : memref<256x512xf32, #tpu.memory_space<vmem>>, vector<256x512xf32>
    %cst_46 = arith.constant dense<0.000000e+00> : vector<8x512xf32>
    %140 = tpu.matmul %138, %139, %cst_46 {dimension_numbers = #tpu.dot_dimension_numbers<[1], [0], [0], [1], [0, 0, 1, 1], [], []>} : vector<8x256xf32>, vector<256x512xf32>, vector<8x512xf32> -> vector<8x512xf32>
    %c0_47 = arith.constant 0 : index
    %c0_48 = arith.constant 0 : index
    %141 = vector.load %arg3[%c0_47, %c0_48] : memref<1x512xf32, #tpu.memory_space<vmem>>, vector<1x512xf32>
    %142 = vector.broadcast %141 : vector<1x512xf32> to vector<8x512xf32>
    %143 = arith.addf %140, %142 : vector<8x512xf32>
    %144 = vector.extract_strided_slice %143 {offsets = [0, 0], sizes = [8, 128], strides = [1, 1]} : vector<8x512xf32> to vector<8x128xf32>
    %145 = arith.negf %144 : vector<8x128xf32>
    %146 = math.exp %145 : vector<8x128xf32>
    %cst_49 = arith.constant 1.000000e+00 : f32
    %147 = vector.broadcast %cst_49 : f32 to vector<8x128xf32>
    %148 = arith.addf %147, %146 : vector<8x128xf32>
    %149 = arith.divf %147, %148 : vector<8x128xf32>
    %150 = vector.extract_strided_slice %143 {offsets = [0, 128], sizes = [8, 128], strides = [1, 1]} : vector<8x512xf32> to vector<8x128xf32>
    %151 = arith.negf %150 : vector<8x128xf32>
    %152 = math.exp %151 : vector<8x128xf32>
    %cst_50 = arith.constant 1.000000e+00 : f32
    %153 = vector.broadcast %cst_50 : f32 to vector<8x128xf32>
    %154 = arith.addf %153, %152 : vector<8x128xf32>
    %155 = arith.divf %153, %154 : vector<8x128xf32>
    %156 = vector.extract_strided_slice %143 {offsets = [0, 256], sizes = [8, 128], strides = [1, 1]} : vector<8x512xf32> to vector<8x128xf32>
    %157 = math.tanh %156 : vector<8x128xf32>
    %158 = vector.extract_strided_slice %143 {offsets = [0, 384], sizes = [8, 128], strides = [1, 1]} : vector<8x512xf32> to vector<8x128xf32>
    %159 = arith.negf %158 : vector<8x128xf32>
    %160 = math.exp %159 : vector<8x128xf32>
    %cst_51 = arith.constant 1.000000e+00 : f32
    %161 = vector.broadcast %cst_51 : f32 to vector<8x128xf32>
    %162 = arith.addf %161, %160 : vector<8x128xf32>
    %163 = arith.divf %161, %162 : vector<8x128xf32>
    %164 = arith.mulf %155, %137 : vector<8x128xf32>
    %165 = arith.mulf %149, %157 : vector<8x128xf32>
    %166 = arith.addf %164, %165 : vector<8x128xf32>
    %167 = math.tanh %166 : vector<8x128xf32>
    %168 = arith.mulf %163, %167 : vector<8x128xf32>
    %c0_52 = arith.constant 0 : index
    %c0_53 = arith.constant 0 : index
    %169 = vector.load %arg4[%c0_52, %c0_53] : memref<128x128xf32, #tpu.memory_space<vmem>>, vector<128x128xf32>
    %cst_54 = arith.constant dense<0.000000e+00> : vector<8x128xf32>
    %170 = tpu.matmul %168, %169, %cst_54 {dimension_numbers = #tpu.dot_dimension_numbers<[1], [0], [0], [1], [0, 0, 1, 1], [], []>} : vector<8x128xf32>, vector<128x128xf32>, vector<8x128xf32> -> vector<8x128xf32>
    %c0_55 = arith.constant 0 : index
    %c0_56 = arith.constant 0 : index
    %171 = vector.load %arg5[%c0_55, %c0_56] : memref<1x128xf32, #tpu.memory_space<vmem>>, vector<1x128xf32>
    %172 = vector.broadcast %171 : vector<1x128xf32> to vector<8x128xf32>
    %173 = arith.addf %170, %172 : vector<8x128xf32>
    %cst_57 = arith.constant dense<0xFF800000> : vector<8xf32>
    %174 = vector.multi_reduction <maximumf>, %173, %cst_57 [1] : vector<8x128xf32> to vector<8xf32>
    %175 = vector.shape_cast %174 : vector<8xf32> to vector<8x1xf32>
    %176 = vector.broadcast %175 : vector<8x1xf32> to vector<8x128xf32>
    %177 = arith.subf %173, %176 : vector<8x128xf32>
    %178 = math.exp %177 : vector<8x128xf32>
    %cst_58 = arith.constant dense<0.000000e+00> : vector<8xf32>
    %179 = vector.multi_reduction <add>, %178, %cst_58 [1] : vector<8x128xf32> to vector<8xf32>
    %180 = vector.shape_cast %179 : vector<8xf32> to vector<8x1xf32>
    %181 = math.log %180 : vector<8x1xf32>
    %182 = arith.addf %175, %181 : vector<8x1xf32>
    %183 = vector.broadcast %182 : vector<8x1xf32> to vector<8x128xf32>
    %184 = arith.subf %173, %183 : vector<8x128xf32>
    %185 = arith.index_cast %c2_i32 : i32 to index
    %c0_59 = arith.constant 0 : index
    %c0_60 = arith.constant 0 : index
    %186 = vector.load %arg6[%185, %c0_59, %c0_60] : memref<4x8x128xf32, #tpu.memory_space<vmem>>, vector<1x8x128xf32>
    %187 = vector.shape_cast %186 : vector<1x8x128xf32> to vector<8x128xf32>
    %188 = vector.shape_cast %184 : vector<8x128xf32> to vector<1x8x128xf32>
    tpu.vector_store %arg6[%185, %c0_59, %c0_60], %188 {strides = array<i32>} : memref<4x8x128xf32, #tpu.memory_space<vmem>>, vector<1x8x128xf32>,
    %189 = vector.broadcast %175 : vector<8x1xf32> to vector<8x128xf32>
    %190 = arith.cmpf oeq, %173, %189 : vector<8x128xf32>
    %c128_i32_61 = arith.constant 128 : i32
    %191 = vector.broadcast %c128_i32_61 : i32 to vector<8x128xi32>
    %192 = arith.select %190, %0, %191 : vector<8x128xi1>, vector<8x128xi32>
    %cst_62 = arith.constant dense<2147483647> : vector<8xi32>
    %193 = vector.multi_reduction <minsi>, %192, %cst_62 [1] : vector<8x128xi32> to vector<8xi32>
    %194 = vector.shape_cast %193 : vector<8xi32> to vector<8x1xi32>
    %195 = vector.broadcast %194 : vector<8x1xi32> to vector<8x128xi32>
    %196 = arith.cmpi eq, %0, %195 : vector<8x128xi32>
    %197 = arith.extui %196 : vector<8x128xi1> to vector<8x128xi32>
    %198 = arith.sitofp %197 : vector<8x128xi32> to vector<8x128xf32>
    %199 = arith.addi %4, %c2_i32 : i32
    %c10_i32_63 = arith.constant 10 : i32
    %200 = arith.cmpi slt, %199, %c10_i32_63 : i32
    %201 = arith.select %200, %168, %136 : vector<8x128xf32>
    %202 = arith.select %200, %166, %137 : vector<8x128xf32>
    %c3_i32 = arith.constant 3 : i32
    %203 = tpu.concatenate %198, %201 in 1 : vector<8x128xf32>, vector<8x128xf32> -> vector<8x256xf32>
    %c0_64 = arith.constant 0 : index
    %c0_65 = arith.constant 0 : index
    %204 = vector.load %arg2[%c0_64, %c0_65] : memref<256x512xf32, #tpu.memory_space<vmem>>, vector<256x512xf32>
    %cst_66 = arith.constant dense<0.000000e+00> : vector<8x512xf32>
    %205 = tpu.matmul %203, %204, %cst_66 {dimension_numbers = #tpu.dot_dimension_numbers<[1], [0], [0], [1], [0, 0, 1, 1], [], []>} : vector<8x256xf32>, vector<256x512xf32>, vector<8x512xf32> -> vector<8x512xf32>
    %c0_67 = arith.constant 0 : index
    %c0_68 = arith.constant 0 : index
    %206 = vector.load %arg3[%c0_67, %c0_68] : memref<1x512xf32, #tpu.memory_space<vmem>>, vector<1x512xf32>
    %207 = vector.broadcast %206 : vector<1x512xf32> to vector<8x512xf32>
    %208 = arith.addf %205, %207 : vector<8x512xf32>
    %209 = vector.extract_strided_slice %208 {offsets = [0, 0], sizes = [8, 128], strides = [1, 1]} : vector<8x512xf32> to vector<8x128xf32>
    %210 = arith.negf %209 : vector<8x128xf32>
    %211 = math.exp %210 : vector<8x128xf32>
    %cst_69 = arith.constant 1.000000e+00 : f32
    %212 = vector.broadcast %cst_69 : f32 to vector<8x128xf32>
    %213 = arith.addf %212, %211 : vector<8x128xf32>
    %214 = arith.divf %212, %213 : vector<8x128xf32>
    %215 = vector.extract_strided_slice %208 {offsets = [0, 128], sizes = [8, 128], strides = [1, 1]} : vector<8x512xf32> to vector<8x128xf32>
    %216 = arith.negf %215 : vector<8x128xf32>
    %217 = math.exp %216 : vector<8x128xf32>
    %cst_70 = arith.constant 1.000000e+00 : f32
    %218 = vector.broadcast %cst_70 : f32 to vector<8x128xf32>
    %219 = arith.addf %218, %217 : vector<8x128xf32>
    %220 = arith.divf %218, %219 : vector<8x128xf32>
    %221 = vector.extract_strided_slice %208 {offsets = [0, 256], sizes = [8, 128], strides = [1, 1]} : vector<8x512xf32> to vector<8x128xf32>
    %222 = math.tanh %221 : vector<8x128xf32>
    %223 = vector.extract_strided_slice %208 {offsets = [0, 384], sizes = [8, 128], strides = [1, 1]} : vector<8x512xf32> to vector<8x128xf32>
    %224 = arith.negf %223 : vector<8x128xf32>
    %225 = math.exp %224 : vector<8x128xf32>
    %cst_71 = arith.constant 1.000000e+00 : f32
    %226 = vector.broadcast %cst_71 : f32 to vector<8x128xf32>
    %227 = arith.addf %226, %225 : vector<8x128xf32>
    %228 = arith.divf %226, %227 : vector<8x128xf32>
    %229 = arith.mulf %220, %202 : vector<8x128xf32>
    %230 = arith.mulf %214, %222 : vector<8x128xf32>
    %231 = arith.addf %229, %230 : vector<8x128xf32>
    %232 = math.tanh %231 : vector<8x128xf32>
    %233 = arith.mulf %228, %232 : vector<8x128xf32>
    %c0_72 = arith.constant 0 : index
    %c0_73 = arith.constant 0 : index
    %234 = vector.load %arg4[%c0_72, %c0_73] : memref<128x128xf32, #tpu.memory_space<vmem>>, vector<128x128xf32>
    %cst_74 = arith.constant dense<0.000000e+00> : vector<8x128xf32>
    %235 = tpu.matmul %233, %234, %cst_74 {dimension_numbers = #tpu.dot_dimension_numbers<[1], [0], [0], [1], [0, 0, 1, 1], [], []>} : vector<8x128xf32>, vector<128x128xf32>, vector<8x128xf32> -> vector<8x128xf32>
    %c0_75 = arith.constant 0 : index
    %c0_76 = arith.constant 0 : index
    %236 = vector.load %arg5[%c0_75, %c0_76] : memref<1x128xf32, #tpu.memory_space<vmem>>, vector<1x128xf32>
    %237 = vector.broadcast %236 : vector<1x128xf32> to vector<8x128xf32>
    %238 = arith.addf %235, %237 : vector<8x128xf32>
    %cst_77 = arith.constant dense<0xFF800000> : vector<8xf32>
    %239 = vector.multi_reduction <maximumf>, %238, %cst_77 [1] : vector<8x128xf32> to vector<8xf32>
    %240 = vector.shape_cast %239 : vector<8xf32> to vector<8x1xf32>
    %241 = vector.broadcast %240 : vector<8x1xf32> to vector<8x128xf32>
    %242 = arith.subf %238, %241 : vector<8x128xf32>
    %243 = math.exp %242 : vector<8x128xf32>
    %cst_78 = arith.constant dense<0.000000e+00> : vector<8xf32>
    %244 = vector.multi_reduction <add>, %243, %cst_78 [1] : vector<8x128xf32> to vector<8xf32>
    %245 = vector.shape_cast %244 : vector<8xf32> to vector<8x1xf32>
    %246 = math.log %245 : vector<8x1xf32>
    %247 = arith.addf %240, %246 : vector<8x1xf32>
    %248 = vector.broadcast %247 : vector<8x1xf32> to vector<8x128xf32>
    %249 = arith.subf %238, %248 : vector<8x128xf32>
    %250 = arith.index_cast %c3_i32 : i32 to index
    %c0_79 = arith.constant 0 : index
    %c0_80 = arith.constant 0 : index
    %251 = vector.load %arg6[%250, %c0_79, %c0_80] : memref<4x8x128xf32, #tpu.memory_space<vmem>>, vector<1x8x128xf32>
    %252 = vector.shape_cast %251 : vector<1x8x128xf32> to vector<8x128xf32>
    %253 = vector.shape_cast %249 : vector<8x128xf32> to vector<1x8x128xf32>
    tpu.vector_store %arg6[%250, %c0_79, %c0_80], %253 {strides = array<i32>} : memref<4x8x128xf32, #tpu.memory_space<vmem>>, vector<1x8x128xf32>,
    %254 = vector.broadcast %240 : vector<8x1xf32> to vector<8x128xf32>
    %255 = arith.cmpf oeq, %238, %254 : vector<8x128xf32>
    %c128_i32_81 = arith.constant 128 : i32
    %256 = vector.broadcast %c128_i32_81 : i32 to vector<8x128xi32>
    %257 = arith.select %255, %0, %256 : vector<8x128xi1>, vector<8x128xi32>
    %cst_82 = arith.constant dense<2147483647> : vector<8xi32>
    %258 = vector.multi_reduction <minsi>, %257, %cst_82 [1] : vector<8x128xi32> to vector<8xi32>
    %259 = vector.shape_cast %258 : vector<8xi32> to vector<8x1xi32>
    %260 = vector.broadcast %259 : vector<8x1xi32> to vector<8x128xi32>
    %261 = arith.cmpi eq, %0, %260 : vector<8x128xi32>
    %262 = arith.extui %261 : vector<8x128xi1> to vector<8x128xi32>
    %263 = arith.sitofp %262 : vector<8x128xi32> to vector<8x128xf32>
    %264 = arith.addi %4, %c3_i32 : i32
    %c10_i32_83 = arith.constant 10 : i32
    %265 = arith.cmpi slt, %264, %c10_i32_83 : i32
    %266 = arith.select %265, %233, %201 : vector<8x128xf32>
    %267 = arith.select %265, %231, %202 : vector<8x128xf32>
    %c4_i32_84 = arith.constant 4 : i32
    %c0_85 = arith.constant 0 : index
    %c0_86 = arith.constant 0 : index
    %268 = vector.load %arg9[%c0_85, %c0_86] : memref<8x128xf32, #tpu.memory_space<vmem>>, vector<8x128xf32>
    tpu.vector_store %arg9[%c0_85, %c0_86], %266 {strides = array<i32>} : memref<8x128xf32, #tpu.memory_space<vmem>>, vector<8x128xf32>,
    %c0_87 = arith.constant 0 : index
    %c0_88 = arith.constant 0 : index
    %269 = vector.load %arg10[%c0_87, %c0_88] : memref<8x128xf32, #tpu.memory_space<vmem>>, vector<8x128xf32>
    tpu.vector_store %arg10[%c0_87, %c0_88], %267 {strides = array<i32>} : memref<8x128xf32, #tpu.memory_space<vmem>>, vector<8x128xf32>,
    %c0_89 = arith.constant 0 : index
    %c0_90 = arith.constant 0 : index
    %270 = vector.load %arg11[%c0_89, %c0_90] : memref<8x128xf32, #tpu.memory_space<vmem>>, vector<8x128xf32>
    tpu.vector_store %arg11[%c0_89, %c0_90], %263 {strides = array<i32>} : memref<8x128xf32, #tpu.memory_space<vmem>>, vector<8x128xf32>,
    %c2_i32_91 = arith.constant 2 : i32
    %271 = arith.cmpi eq, %arg0, %c2_i32_91 : i32
    %272 = arith.extui %271 : i1 to i32
    %c0_i32_92 = arith.constant 0 : i32
    %273 = arith.cmpi ne, %272, %c0_i32_92 : i32
    scf.if %273 {
      %c0_93 = arith.constant 0 : index
      %c0_94 = arith.constant 0 : index
      %274 = vector.load %arg7[%c0_93, %c0_94] : memref<8x128xf32, #tpu.memory_space<vmem>>, vector<8x128xf32>
      tpu.vector_store %arg7[%c0_93, %c0_94], %266 {strides = array<i32>} : memref<8x128xf32, #tpu.memory_space<vmem>>, vector<8x128xf32>,
      %c0_95 = arith.constant 0 : index
      %c0_96 = arith.constant 0 : index
      %275 = vector.load %arg8[%c0_95, %c0_96] : memref<8x128xf32, #tpu.memory_space<vmem>>, vector<8x128xf32>
      tpu.vector_store %arg8[%c0_95, %c0_96], %267 {strides = array<i32>} : memref<8x128xf32, #tpu.memory_space<vmem>>, vector<8x128xf32>,
    } else {
    }
    return
  }
  func.func @transform_0(%arg0: i32) -> (i32, i32) {
    %c0_i32 = arith.constant 0 : i32
    %c0_i32_0 = arith.constant 0 : i32
    %c0_i32_1 = arith.constant 0 : i32
    return %c0_i32, %c0_i32_0 : i32, i32
  }
  func.func @transform_1(%arg0: i32) -> (i32, i32) {
    %c0_i32 = arith.constant 0 : i32
    %c0_i32_0 = arith.constant 0 : i32
    %c0_i32_1 = arith.constant 0 : i32
    return %c0_i32, %c0_i32_0 : i32, i32
  }
  func.func @transform_2(%arg0: i32) -> (i32, i32) {
    %c0_i32 = arith.constant 0 : i32
    %c0_i32_0 = arith.constant 0 : i32
    %c0_i32_1 = arith.constant 0 : i32
    return %c0_i32, %c0_i32_0 : i32, i32
  }
  func.func @transform_3(%arg0: i32) -> (i32, i32) {
    %c0_i32 = arith.constant 0 : i32
    %c0_i32_0 = arith.constant 0 : i32
    %c0_i32_1 = arith.constant 0 : i32
    return %c0_i32, %c0_i32_0 : i32, i32
  }
  func.func @transform_4(%arg0: i32) -> (i32, i32) {
    %c0_i32 = arith.constant 0 : i32
    %c0_i32_0 = arith.constant 0 : i32
    %c0_i32_1 = arith.constant 0 : i32
    return %c0_i32, %c0_i32_0 : i32, i32
  }
  func.func @transform_5(%arg0: i32) -> (i32, i32, i32) {
    %c0_i32 = arith.constant 0 : i32
    %c0_i32_0 = arith.constant 0 : i32
    %c0_i32_1 = arith.constant 0 : i32
    return %arg0, %c0_i32, %c0_i32_0 : i32, i32, i32
  }
  func.func @transform_6(%arg0: i32) -> (i32, i32) {
    %c0_i32 = arith.constant 0 : i32
    %c0_i32_0 = arith.constant 0 : i32
    %c0_i32_1 = arith.constant 0 : i32
    return %c0_i32, %c0_i32_0 : i32, i32
  }
  func.func @transform_7(%arg0: i32) -> (i32, i32) {
    %c0_i32 = arith.constant 0 : i32
    %c0_i32_0 = arith.constant 0 : i32
    %c0_i32_1 = arith.constant 0 : i32
    return %c0_i32, %c0_i32_0 : i32, i32
  }
}

</mosaic_0001>

<llo_original>
// kernel: tpu_custom_call.1
$region0: #{tpu_custom_call.1}
  #allocation0 [shape = 'u32[]', space=smem, size = 0x4, offset = 0x4, fixed_abs, tag = 'smem constant byte address 0x4 - core index']
  #allocation1 [shape = 'u32[144,128]{1,0:T(1,128)}', space=vmem, size = 0x12000, scoped, tag = 'internal scratch']
  #allocation2 [shape = 'f32[8,128]{1,0:T(8,128)}', space=vmem, size = 0x1000, scoped, tag = 'scratch operand']
  #allocation3 [shape = 'f32[8,128]{1,0:T(8,128)}', space=vmem, size = 0x1000, scoped, tag = 'scratch operand']
  #allocation4 [shape = 'f32[8,128]{1,0:T(8,128)}', space=vmem, size = 0x1000, scoped, tag = 'scratch operand']
  %s0 = inlined_call_operand.hbm [shape: f32[8,128], index: 0, kind: input, shape index: {}]
  %s1 = inlined_call_operand.hbm [shape: f32[256,512], index: 1, kind: input, shape index: {}]
  %s2 = inlined_call_operand.vmem [shape: f32[1,512], index: 2, kind: input, shape index: {}]
  %s3 = inlined_call_operand.hbm [shape: f32[128,128], index: 3, kind: input, shape index: {}]
  %s4 = inlined_call_operand.vmem [shape: f32[1,128], index: 4, kind: input, shape index: {}]
  %s5 = inlined_call_operand.hbm [shape: f32[12,8,128], index: 5, kind: output, shape index: {0}]
  %s6 = inlined_call_operand.hbm [shape: f32[8,128], index: 6, kind: output, shape index: {1}]
  %s7 = inlined_call_operand.hbm [shape: f32[8,128], index: 7, kind: output, shape index: {2}]
  %8 = xla_tuple %s5, %s6, %s7
  %s9 = sld [smem:[#allocation0]]
  $region89: #{tpu_custom_call.1} parent=0
    _
  %s11 = ssub.s32 1, %s9
  %s12 = scalar_select 0, %s11, %s9
  $region1: #{tpu_custom_call.1} parent=0
    #allocation5 [shape = 'u8[4096]{0}', space=vmem, size = 0x1000, scoped, tag = 'input window, operand 0, single buffered']
    #allocation6 [shape = 's32[2]{0}', space=sflag, size = 0x8, scoped, tag = 'scoped memory for tpu_custom_call.1']
    #allocation7 [shape = 's32[2]{0}', space=sflag, size = 0x8, scoped, tag = 'scoped memory for tpu_custom_call.1']
    #allocation8 [shape = 'u8[524288]{0}', space=vmem, size = 0x80000, scoped, tag = 'input window, operand 1, single buffered']
    #allocation9 [shape = 's32[1]{0}', space=sflag, size = 0x4, scoped, tag = 'scoped memory for tpu_custom_call.1']
    #allocation10 [shape = 'u8[65536]{0}', space=vmem, size = 0x10000, scoped, tag = 'input window, operand 3, single buffered']
    #allocation11 [shape = 'u8[32768]{0}', space=vmem, size = 0x8000, scoped, tag = 'output window, operand 0']
    #allocation12 [shape = 'u8[4096]{0}', space=vmem, size = 0x1000, scoped, tag = 'output window, operand 1, single buffered']
    #allocation13 [shape = 's32[1]{0}', space=sflag, size = 0x4, scoped, tag = 'scoped memory for tpu_custom_call.1']
    #allocation14 [shape = 'u8[4096]{0}', space=vmem, size = 0x1000, scoped, tag = 'output window, operand 2, single buffered']
    %13 = vsyncpa [#allocation6], 0
    %14 = vsyncpa [#allocation9], 0
    %15 = vsyncpa [#allocation7], 0
    %s16 = scalar_lea.sflag [#allocation7], 1
    %17 = vsyncpa %s16, 0
    %18 = vsyncpa [#allocation13], 0
    loop: start=0, step=1, limit=5
    $region2: #{tpu_custom_call.1} parent=1 // loop_pre_header
      _
    $region3: #{tpu_custom_call.1} parent=1 // loop_header
      %s20 = sphi 0, %s24
      %p21 = scmp.ge.s32.totalorder %s20, 5
      %s28 = sphi 0, %s28
      %s30 = sphi 0, %s28
      %s31 = sphi 0, %s30
      %s45 = sphi 0, %s31
      %s49 = sphi 0, %s49
      %s51 = sphi 0, %s49
      %s52 = sphi 0, %s51
      %s66 = sphi 0, %s52
      %s70 = sphi 0, %s70
      %s72 = sphi 0, %s70
      %s73 = sphi 0, %s72
      %s87 = sphi 0, %s73
      %s91 = sphi 0, %s91
      %s93 = sphi 0, %s91
      %s94 = sphi 0, %s93
      %s108 = sphi 0, %s94
      %s112 = sphi 0, %s112
      %s114 = sphi 0, %s112
      %s115 = sphi 0, %s114
      %s129 = sphi 0, %s115
      %s135 = sphi 0, %s137
      %s138 = sphi 0, %s135
      %s139 = sphi 0, %s138
      %s155 = sphi 0, %s139
      %s159 = sphi 0, %s159
      %s161 = sphi 0, %s159
      %s162 = sphi 0, %s161
      %s176 = sphi 0, %s162
      %s180 = sphi 0, %s180
      %s182 = sphi 0, %s180
      %s183 = sphi 0, %s182
      %s197 = sphi 0, %s183
    $region4: #{tpu_custom_call.1} parent=1 // loop_header_branch
      %23 = sbr.rel (%p21) target = $region8
    $region5: #{tpu_custom_call.1} parent=1 // loop_body
      %s25 = ssub.s32 %s20, 1
      %s26 = ssub.s32 %s20, 2
      %s27 = sadd.s32 %s20, 1
      %s29 = sadd.s32 %s28, 1
      %p32 = scmp.eq.s32.totalorder %s20, 2
      %p33 = scmp.ne.s32.totalorder %s28, %s30
      %p34 = scmp.eq.s32.totalorder %s20, 0
      %p35 = por %p33, %p34
      %p36 = scmp.ne.s32.totalorder %s28, %s30
      %p37 = scmp.eq.s32.totalorder %s25, 2
      %p38 = por %p36, %p37
      %p39 = scmp.ne.s32.totalorder %s30, %s31
      %p40 = scmp.eq.s32.totalorder %s25, 0
      %p41 = por %p39, %p40
      %p42 = scmp.ne.s32.totalorder %s30, %s31
      %p43 = scmp.eq.s32.totalorder %s26, 2
      %p44 = por %p42, %p43
      %p46 = scmp.ne.s32.totalorder %s31, %s45
      %p47 = scmp.eq.s32.totalorder %s26, 0
      %p48 = por %p46, %p47
      %s50 = sadd.s32 %s49, 1
      %p53 = scmp.eq.s32.totalorder %s20, 2
      %p54 = scmp.ne.s32.totalorder %s49, %s51
      %p55 = scmp.eq.s32.totalorder %s20, 0
      %p56 = por %p54, %p55
      %p57 = scmp.ne.s32.totalorder %s49, %s51
      %p58 = scmp.eq.s32.totalorder %s25, 2
      %p59 = por %p57, %p58
      %p60 = scmp.ne.s32.totalorder %s51, %s52
      %p61 = scmp.eq.s32.totalorder %s25, 0
      %p62 = por %p60, %p61
      %p63 = scmp.ne.s32.totalorder %s51, %s52
      %p64 = scmp.eq.s32.totalorder %s26, 2
      %p65 = por %p63, %p64
      %p67 = scmp.ne.s32.totalorder %s52, %s66
      %p68 = scmp.eq.s32.totalorder %s26, 0
      %p69 = por %p67, %p68
      %s71 = sadd.s32 %s70, 1
      %p74 = scmp.eq.s32.totalorder %s20, 2
      %p75 = scmp.ne.s32.totalorder %s70, %s72
      %p76 = scmp.eq.s32.totalorder %s20, 0
      %p77 = por %p75, %p76
      %p78 = scmp.ne.s32.totalorder %s70, %s72
      %p79 = scmp.eq.s32.totalorder %s25, 2
      %p80 = por %p78, %p79
      %p81 = scmp.ne.s32.totalorder %s72, %s73
      %p82 = scmp.eq.s32.totalorder %s25, 0
      %p83 = por %p81, %p82
      %p84 = scmp.ne.s32.totalorder %s72, %s73
      %p85 = scmp.eq.s32.totalorder %s26, 2
      %p86 = por %p84, %p85
      %p88 = scmp.ne.s32.totalorder %s73, %s87
      %p89 = scmp.eq.s32.totalorder %s26, 0
      %p90 = por %p88, %p89
      %s92 = sadd.s32 %s91, 1
      %p95 = scmp.eq.s32.totalorder %s20, 2
      %p96 = scmp.ne.s32.totalorder %s91, %s93
      %p97 = scmp.eq.s32.totalorder %s20, 0
      %p98 = por %p96, %p97
      %p99 = scmp.ne.s32.totalorder %s91, %s93
      %p100 = scmp.eq.s32.totalorder %s25, 2
      %p101 = por %p99, %p100
      %p102 = scmp.ne.s32.totalorder %s93, %s94
      %p103 = scmp.eq.s32.totalorder %s25, 0
      %p104 = por %p102, %p103
      %p105 = scmp.ne.s32.totalorder %s93, %s94
      %p106 = scmp.eq.s32.totalorder %s26, 2
      %p107 = por %p105, %p106
      %p109 = scmp.ne.s32.totalorder %s94, %s108
      %p110 = scmp.eq.s32.totalorder %s26, 0
      %p111 = por %p109, %p110
      %s113 = sadd.s32 %s112, 1
      %p116 = scmp.eq.s32.totalorder %s20, 2
      %p117 = scmp.ne.s32.totalorder %s112, %s114
      %p118 = scmp.eq.s32.totalorder %s20, 0
      %p119 = por %p117, %p118
      %p120 = scmp.ne.s32.totalorder %s112, %s114
      %p121 = scmp.eq.s32.totalorder %s25, 2
      %p122 = por %p120, %p121
      %p123 = scmp.ne.s32.totalorder %s114, %s115
      %p124 = scmp.eq.s32.totalorder %s25, 0
      %p125 = por %p123, %p124
      %p126 = scmp.ne.s32.totalorder %s114, %s115
      %p127 = scmp.eq.s32.totalorder %s26, 2
      %p128 = por %p126, %p127
      %p130 = scmp.ne.s32.totalorder %s115, %s129
      %p131 = scmp.eq.s32.totalorder %s26, 0
      %p132 = por %p130, %p131
      %s133 = ssub.s32 %s20, %s27
      %p134 = scmp.eq.s32.totalorder %s133, 0
      %s136 = sadd.s32 %s135, 1
      %s137 = scalar_select %p134, %s135, %s136
      %p140 = pneg %p134
      %p141 = scmp.eq.s32.totalorder %s20, 2
      %p142 = por %p140, %p141
      %p143 = scmp.ne.s32.totalorder %s135, %s138
      %p144 = scmp.eq.s32.totalorder %s20, 0
      %p145 = por %p143, %p144
      %p146 = scmp.ne.s32.totalorder %s135, %s138
      %p147 = scmp.eq.s32.totalorder %s25, 2
      %p148 = por %p146, %p147
      %p149 = scmp.ne.s32.totalorder %s138, %s139
      %p150 = scmp.eq.s32.totalorder %s25, 0
      %p151 = por %p149, %p150
      %p152 = scmp.ne.s32.totalorder %s138, %s139
      %p153 = scmp.eq.s32.totalorder %s26, 2
      %p154 = por %p152, %p153
      %p156 = scmp.ne.s32.totalorder %s139, %s155
      %p157 = scmp.eq.s32.totalorder %s26, 0
      %p158 = por %p156, %p157
      %s160 = sadd.s32 %s159, 1
      %p163 = scmp.eq.s32.totalorder %s20, 2
      %p164 = scmp.ne.s32.totalorder %s159, %s161
      %p165 = scmp.eq.s32.totalorder %s20, 0
      %p166 = por %p164, %p165
      %p167 = scmp.ne.s32.totalorder %s159, %s161
      %p168 = scmp.eq.s32.totalorder %s25, 2
      %p169 = por %p167, %p168
      %p170 = scmp.ne.s32.totalorder %s161, %s162
      %p171 = scmp.eq.s32.totalorder %s25, 0
      %p172 = por %p170, %p171
      %p173 = scmp.ne.s32.totalorder %s161, %s162
      %p174 = scmp.eq.s32.totalorder %s26, 2
      %p175 = por %p173, %p174
      %p177 = scmp.ne.s32.totalorder %s162, %s176
      %p178 = scmp.eq.s32.totalorder %s26, 0
      %p179 = por %p177, %p178
      %s181 = sadd.s32 %s180, 1
      %p184 = scmp.eq.s32.totalorder %s20, 2
      %p185 = scmp.ne.s32.totalorder %s180, %s182
      %p186 = scmp.eq.s32.totalorder %s20, 0
      %p187 = por %p185, %p186
      %p188 = scmp.ne.s32.totalorder %s180, %s182
      %p189 = scmp.eq.s32.totalorder %s25, 2
      %p190 = por %p188, %p189
      %p191 = scmp.ne.s32.totalorder %s182, %s183
      %p192 = scmp.eq.s32.totalorder %s25, 0
      %p193 = por %p191, %p192
      %p194 = scmp.ne.s32.totalorder %s182, %s183
      %p195 = scmp.eq.s32.totalorder %s26, 2
      %p196 = por %p194, %p195
      %p198 = scmp.ne.s32.totalorder %s183, %s197
      %p199 = scmp.eq.s32.totalorder %s26, 0
      %p200 = por %p198, %p199
      %p201 = scmp.le.s32.totalorder 1, %s20
      %p202 = scmp.lt.s32.totalorder %s20, 4
      %p203 = pnand %p201, %p202
      %p204 = pneg %p203
      // Predicated region
      $region9: #{tpu_custom_call.1} parent=5 // pred_check
        _
      $region10: #{tpu_custom_call.1} parent=5 // pred_check_branch
        %206 = sbr.rel (%p203) target = $region12
      $region11: #{tpu_custom_call.1} parent=5 // pred_region
        %s207 = ssub.s32 %s20, 1
        // Predicated region
        $region13: #{tpu_custom_call.1} parent=11 // pred_check
          %p208 = pneg %p41
        $region14: #{tpu_custom_call.1} parent=11 // pred_check_branch
          %210 = sbr.rel (%p208) target = $region16
        $region15: #{tpu_custom_call.1} parent=11 // pred_region
          %s212 = ssub.s32 128, 128
          %213 = vsyncadd [#allocation6], %s212
          %s215 = sshll.u32 [#allocation5], 4
          %s216 = int_to_ptr.vmem [resolvable:$true] %s215
          %218 = dma.hbm_to_vmem [thread:$0]  %s0, 128, %s216, [#allocation6]
        $region16: #{tpu_custom_call.1} parent=11 // pred_fallthru
          _
        // Predicated region
        $region17: #{tpu_custom_call.1} parent=11 // pred_check
          %p219 = pneg %p62
        $region18: #{tpu_custom_call.1} parent=11 // pred_check_branch
          %221 = sbr.rel (%p219) target = $region20
        $region19: #{tpu_custom_call.1} parent=11 // pred_region
          %s223 = ssub.s32 16384, 16384
          %224 = vsyncadd [#allocation9], %s223
          %s225 = sshll.u32 [#allocation8], 4
          %s226 = int_to_ptr.vmem [resolvable:$true] %s225
          %231 = dma.hbm_to_vmem [thread:$0]  %s1, 16384, %s226, [#allocation9], 512, 512, 32
        $region20: #{tpu_custom_call.1} parent=11 // pred_fallthru
          _
        // Predicated region
        $region21: #{tpu_custom_call.1} parent=11 // pred_check
          %p232 = pneg %p83
        $region22: #{tpu_custom_call.1} parent=11 // pred_check_branch
          %234 = sbr.rel (%p232) target = $region24
        $region23: #{tpu_custom_call.1} parent=11 // pred_region
          _
        $region24: #{tpu_custom_call.1} parent=11 // pred_fallthru
          _
        // Predicated region
        $region25: #{tpu_custom_call.1} parent=11 // pred_check
          %p235 = pneg %p104
        $region26: #{tpu_custom_call.1} parent=11 // pred_check_branch
          %237 = sbr.rel (%p235) target = $region28
        $region27: #{tpu_custom_call.1} parent=11 // pred_region
          %s239 = ssub.s32 2048, 2048
          %240 = vsyncadd [#allocation9], %s239
          %s241 = sshll.u32 [#allocation10], 4
          %s242 = int_to_ptr.vmem [resolvable:$true] %s241
          %247 = dma.hbm_to_vmem [thread:$0]  %s3, 2048, %s242, [#allocation9], 128, 128, 8
        $region28: #{tpu_custom_call.1} parent=11 // pred_fallthru
          _
        // Predicated region
        $region29: #{tpu_custom_call.1} parent=11 // pred_check
          %p248 = pneg %p125
        $region30: #{tpu_custom_call.1} parent=11 // pred_check_branch
          %250 = sbr.rel (%p248) target = $region32
        $region31: #{tpu_custom_call.1} parent=11 // pred_region
          _
        $region32: #{tpu_custom_call.1} parent=11 // pred_fallthru
          _
      $region12: #{tpu_custom_call.1} parent=5 // pred_fallthru
        _
      %p251 = scmp.lt.s32.totalorder %s20, 3
      // Predicated region
      $region33: #{tpu_custom_call.1} parent=5 // pred_check
        %p252 = pneg %p251
      $region34: #{tpu_custom_call.1} parent=5 // pred_check_branch
        %254 = sbr.rel (%p252) target = $region36
      $region35: #{tpu_custom_call.1} parent=5 // pred_region
        _
      $region36: #{tpu_custom_call.1} parent=5 // pred_fallthru
        _
      %p255 = scmp.le.s32.totalorder 1, %s20
      %p256 = scmp.lt.s32.totalorder %s20, 4
      %p257 = pnand %p255, %p256
      %p258 = pneg %p257
      // Predicated region
      $region37: #{tpu_custom_call.1} parent=5 // pred_check
        _
      $region38: #{tpu_custom_call.1} parent=5 // pred_check_branch
        %260 = sbr.rel (%p257) target = $region40
      $region39: #{tpu_custom_call.1} parent=5 // pred_region
        %s261 = ssub.s32 %s20, 1
        // Predicated region
        $region41: #{tpu_custom_call.1} parent=39 // pred_check
          %p262 = pneg %p41
        $region42: #{tpu_custom_call.1} parent=39 // pred_check_branch
          %264 = sbr.rel (%p262) target = $region44
        $region43: #{tpu_custom_call.1} parent=39 // pred_region
          %265 = dma.done [#allocation6], 128
        $region44: #{tpu_custom_call.1} parent=39 // pred_fallthru
          _
        // Predicated region
        $region45: #{tpu_custom_call.1} parent=39 // pred_check
          %p266 = pneg %p62
        $region46: #{tpu_custom_call.1} parent=39 // pred_check_branch
          %268 = sbr.rel (%p266) target = $region48
        $region47: #{tpu_custom_call.1} parent=39 // pred_region
          %269 = dma.done [#allocation9], 16384
        $region48: #{tpu_custom_call.1} parent=39 // pred_fallthru
          _
        // Predicated region
        $region49: #{tpu_custom_call.1} parent=39 // pred_check
          %p270 = pneg %p104
        $region50: #{tpu_custom_call.1} parent=39 // pred_check_branch
          %272 = sbr.rel (%p270) target = $region52
        $region51: #{tpu_custom_call.1} parent=39 // pred_region
          %273 = dma.done [#allocation9], 2048
        $region52: #{tpu_custom_call.1} parent=39 // pred_fallthru
          _
        %p274 = pneg %p41
        %p275 = pneg %p38
        %p276 = pneg %p62
        %p277 = pneg %p59
        %p278 = pneg %p83
        %p279 = pneg %p80
        %p280 = pneg %p104
        %p281 = pneg %p101
        %p282 = pneg %p125
        %p283 = pneg %p122
        %p284 = pneg %p151
        %p285 = pneg %p148
        %s286 = sand.u32 %s138, 1
        %s287 = scalar_lea.sflag [#allocation7], %s286
        %s288 = sand.u32 %s138, 1
        %s289 = smul.addr %s288, 32
        %s290 = scalar_lea.vmem [#allocation11], %s289
        %p291 = pneg %p172
        %p292 = pneg %p169
        %p293 = pneg %p193
        %p294 = pneg %p190
        %s295 = smul.u32 4, %s25
        %v296 = vlaneseq
        %v297 = vand.u32 %v296, 127
        %p298 = scmp.eq.s32.totalorder %s25, 0
        // Predicated region
        $region53: #{tpu_custom_call.1} parent=39 // pred_check
          %p299 = pneg %p298
        $region54: #{tpu_custom_call.1} parent=39 // pred_check_branch
          %301 = sbr.rel (%p299) target = $region56
        $region55: #{tpu_custom_call.1} parent=39 // pred_region
          %v302 = vld [vmem:[#allocation5] sm:$0xff]
          %303 = vst [vmem:[#allocation2] sm:$0xff] %v302
          %304 = vst [vmem:[#allocation3] sm:$0xff] 0.0
          %vm305 = vcmp.eq.s32.totalorder %v297, 1
          %v306 = vsel %vm305, 1, 0
          %v307 = vcvt.s32.f32 %v306
          %308 = vst [vmem:[#allocation4] sm:$0xff] %v307
        $region56: #{tpu_custom_call.1} parent=39 // pred_fallthru
          _
        %s309 = smul.u32 %s25, 4
        %v310 = vld [vmem:[#allocation2] sm:$0xff]
        %v311 = vld [vmem:[#allocation3] sm:$0xff]
        %v312 = vld [vmem:[#allocation4] sm:$0xff]
        %v313 = vld [vmem:[#allocation8] sm:$0xff]
        %v314 = vld [vmem:[#allocation8 + $0x8] sm:$0xff]
        %v315 = vld [vmem:[#allocation8 + $0x10] sm:$0xff]
        %v316 = vld [vmem:[#allocation8 + $0x18] sm:$0xff]
        %v317 = vld [vmem:[#allocation8 + $0x20] sm:$0xff]
        %v318 = vld [vmem:[#allocation8 + $0x28] sm:$0xff]
        %v319 = vld [vmem:[#allocation8 + $0x30] sm:$0xff]
        %v320 = vld [vmem:[#allocation8 + $0x38] sm:$0xff]
        %v321 = vld [vmem:[#allocation8 + $0x40] sm:$0xff]
        %v322 = vld [vmem:[#allocation8 + $0x48] sm:$0xff]
        %v323 = vld [vmem:[#allocation8 + $0x50] sm:$0xff]
        %v324 = vld [vmem:[#allocation8 + $0x58] sm:$0xff]
        %v325 = vld [vmem:[#allocation8 + $0x60] sm:$0xff]
        %v326 = vld [vmem:[#allocation8 + $0x68] sm:$0xff]
        %v327 = vld [vmem:[#allocation8 + $0x70] sm:$0xff]
        %v328 = vld [vmem:[#allocation8 + $0x78] sm:$0xff]
        %v329 = vld [vmem:[#allocation8 + $0x80] sm:$0xff]
        %v330 = vld [vmem:[#allocation8 + $0x88] sm:$0xff]
        %v331 = vld [vmem:[#allocation8 + $0x90] sm:$0xff]
        %v332 = vld [vmem:[#allocation8 + $0x98] sm:$0xff]
        %v333 = vld [vmem:[#allocation8 + $0xa0] sm:$0xff]
        %v334 = vld [vmem:[#allocation8 + $0xa8] sm:$0xff]
        %v335 = vld [vmem:[#allocation8 + $0xb0] sm:$0xff]
        %v336 = vld [vmem:[#allocation8 + $0xb8] sm:$0xff]
        %v337 = vld [vmem:[#allocation8 + $0xc0] sm:$0xff]
        %v338 = vld [vmem:[#allocation8 + $0xc8] sm:$0xff]
        %v339 = vld [vmem:[#allocation8 + $0xd0] sm:$0xff]
        %v340 = vld [vmem:[#allocation8 + $0xd8] sm:$0xff]
        %v341 = vld [vmem:[#allocation8 + $0xe0] sm:$0xff]
        %v342 = vld [vmem:[#allocation8 + $0xe8] sm:$0xff]
        %v343 = vld [vmem:[#allocation8 + $0xf0] sm:$0xff]
        %v344 = vld [vmem:[#allocation8 + $0xf8] sm:$0xff]
        %v345 = vld [vmem:[#allocation8 + $0x100] sm:$0xff]
        %v346 = vld [vmem:[#allocation8 + $0x108] sm:$0xff]
        %v347 = vld [vmem:[#allocation8 + $0x110] sm:$0xff]
        %v348 = vld [vmem:[#allocation8 + $0x118] sm:$0xff]
        %v349 = vld [vmem:[#allocation8 + $0x120] sm:$0xff]
        %v350 = vld [vmem:[#allocation8 + $0x128] sm:$0xff]
        %v351 = vld [vmem:[#allocation8 + $0x130] sm:$0xff]
        %v352 = vld [vmem:[#allocation8 + $0x138] sm:$0xff]
        %v353 = vld [vmem:[#allocation8 + $0x140] sm:$0xff]
        %v354 = vld [vmem:[#allocation8 + $0x148] sm:$0xff]
        %v355 = vld [vmem:[#allocation8 + $0x150] sm:$0xff]
        %v356 = vld [vmem:[#allocation8 + $0x158] sm:$0xff]
        %v357 = vld [vmem:[#allocation8 + $0x160] sm:$0xff]
        %v358 = vld [vmem:[#allocation8 + $0x168] sm:$0xff]
        %v359 = vld [vmem:[#allocation8 + $0x170] sm:$0xff]
        %v360 = vld [vmem:[#allocation8 + $0x178] sm:$0xff]
        %v361 = vld [vmem:[#allocation8 + $0x180] sm:$0xff]
        %v362 = vld [vmem:[#allocation8 + $0x188] sm:$0xff]
        %v363 = vld [vmem:[#allocation8 + $0x190] sm:$0xff]
        %v364 = vld [vmem:[#allocation8 + $0x198] sm:$0xff]
        %v365 = vld [vmem:[#allocation8 + $0x1a0] sm:$0xff]
        %v366 = vld [vmem:[#allocation8 + $0x1a8] sm:$0xff]
        %v367 = vld [vmem:[#allocation8 + $0x1b0] sm:$0xff]
        %v368 = vld [vmem:[#allocation8 + $0x1b8] sm:$0xff]
        %v369 = vld [vmem:[#allocation8 + $0x1c0] sm:$0xff]
        %v370 = vld [vmem:[#allocation8 + $0x1c8] sm:$0xff]
        %v371 = vld [vmem:[#allocation8 + $0x1d0] sm:$0xff]
        %v372 = vld [vmem:[#allocation8 + $0x1d8] sm:$0xff]
        %v373 = vld [vmem:[#allocation8 + $0x1e0] sm:$0xff]
        %v374 = vld [vmem:[#allocation8 + $0x1e8] sm:$0xff]
        %v375 = vld [vmem:[#allocation8 + $0x1f0] sm:$0xff]
        %v376 = vld [vmem:[#allocation8 + $0x1f8] sm:$0xff]
        %v377 = vld [vmem:[#allocation8 + $0x200] sm:$0xff]
        %v378 = vld [vmem:[#allocation8 + $0x208] sm:$0xff]
        %v379 = vld [vmem:[#allocation8 + $0x210] sm:$0xff]
        %v380 = vld [vmem:[#allocation8 + $0x218] sm:$0xff]
        %v381 = vld [vmem:[#allocation8 + $0x220] sm:$0xff]
        %v382 = vld [vmem:[#allocation8 + $0x228] sm:$0xff]
        %v383 = vld [vmem:[#allocation8 + $0x230] sm:$0xff]
        %v384 = vld [vmem:[#allocation8 + $0x238] sm:$0xff]
        %v385 = vld [vmem:[#allocation8 + $0x240] sm:$0xff]
        %v386 = vld [vmem:[#allocation8 + $0x248] sm:$0xff]
        %v387 = vld [vmem:[#allocation8 + $0x250] sm:$0xff]
        %v388 = vld [vmem:[#allocation8 + $0x258] sm:$0xff]
        %v389 = vld [vmem:[#allocation8 + $0x260] sm:$0xff]
        %v390 = vld [vmem:[#allocation8 + $0x268] sm:$0xff]
        %v391 = vld [vmem:[#allocation8 + $0x270] sm:$0xff]
        %v392 = vld [vmem:[#allocation8 + $0x278] sm:$0xff]
        %v393 = vld [vmem:[#allocation8 + $0x280] sm:$0xff]
        %v394 = vld [vmem:[#allocation8 + $0x288] sm:$0xff]
        %v395 = vld [vmem:[#allocation8 + $0x290] sm:$0xff]
        %v396 = vld [vmem:[#allocation8 + $0x298] sm:$0xff]
        %v397 = vld [vmem:[#allocation8 + $0x2a0] sm:$0xff]
        %v398 = vld [vmem:[#allocation8 + $0x2a8] sm:$0xff]
        %v399 = vld [vmem:[#allocation8 + $0x2b0] sm:$0xff]
        %v400 = vld [vmem:[#allocation8 + $0x2b8] sm:$0xff]
        %v401 = vld [vmem:[#allocation8 + $0x2c0] sm:$0xff]
        %v402 = vld [vmem:[#allocation8 + $0x2c8] sm:$0xff]
        %v403 = vld [vmem:[#allocation8 + $0x2d0] sm:$0xff]
        %v404 = vld [vmem:[#allocation8 + $0x2d8] sm:$0xff]
        %v405 = vld [vmem:[#allocation8 + $0x2e0] sm:$0xff]
        %v406 = vld [vmem:[#allocation8 + $0x2e8] sm:$0xff]
        %v407 = vld [vmem:[#allocation8 + $0x2f0] sm:$0xff]
        %v408 = vld [vmem:[#allocation8 + $0x2f8] sm:$0xff]
        %v409 = vld [vmem:[#allocation8 + $0x300] sm:$0xff]
        %v410 = vld [vmem:[#allocation8 + $0x308] sm:$0xff]
        %v411 = vld [vmem:[#allocation8 + $0x310] sm:$0xff]
        %v412 = vld [vmem:[#allocation8 + $0x318] sm:$0xff]
        %v413 = vld [vmem:[#allocation8 + $0x320] sm:$0xff]
        %v414 = vld [vmem:[#allocation8 + $0x328] sm:$0xff]
        %v415 = vld [vmem:[#allocation8 + $0x330] sm:$0xff]
        %v416 = vld [vmem:[#allocation8 + $0x338] sm:$0xff]
        %v417 = vld [vmem:[#allocation8 + $0x340] sm:$0xff]
        %v418 = vld [vmem:[#allocation8 + $0x348] sm:$0xff]
        %v419 = vld [vmem:[#allocation8 + $0x350] sm:$0xff]
        %v420 = vld [vmem:[#allocation8 + $0x358] sm:$0xff]
        %v421 = vld [vmem:[#allocation8 + $0x360] sm:$0xff]
        %v422 = vld [vmem:[#allocation8 + $0x368] sm:$0xff]
        %v423 = vld [vmem:[#allocation8 + $0x370] sm:$0xff]
        %v424 = vld [vmem:[#allocation8 + $0x378] sm:$0xff]
        %v425 = vld [vmem:[#allocation8 + $0x380] sm:$0xff]
        %v426 = vld [vmem:[#allocation8 + $0x388] sm:$0xff]
        %v427 = vld [vmem:[#allocation8 + $0x390] sm:$0xff]
        %v428 = vld [vmem:[#allocation8 + $0x398] sm:$0xff]
        %v429 = vld [vmem:[#allocation8 + $0x3a0] sm:$0xff]
        %v430 = vld [vmem:[#allocation8 + $0x3a8] sm:$0xff]
        %v431 = vld [vmem:[#allocation8 + $0x3b0] sm:$0xff]
        %v432 = vld [vmem:[#allocation8 + $0x3b8] sm:$0xff]
        %v433 = vld [vmem:[#allocation8 + $0x3c0] sm:$0xff]
        %v434 = vld [vmem:[#allocation8 + $0x3c8] sm:$0xff]
        %v435 = vld [vmem:[#allocation8 + $0x3d0] sm:$0xff]
        %v436 = vld [vmem:[#allocation8 + $0x3d8] sm:$0xff]
        %v437 = vld [vmem:[#allocation8 + $0x3e0] sm:$0xff]
        %v438 = vld [vmem:[#allocation8 + $0x3e8] sm:$0xff]
        %v439 = vld [vmem:[#allocation8 + $0x3f0] sm:$0xff]
        %v440 = vld [vmem:[#allocation8 + $0x3f8] sm:$0xff]
        %v441 = vld [vmem:[%s2] sm:$0xf]
        %v443 = vlaneseq
        %v444 = vshrl.u32 %v443, 7
        %v445 = vsub.s32 0, %v444
        %v446 = vrot.slane %v441, %v445
        %v447 = vlaneseq
        %v448 = vshrl.u32 %v447, 7
        %v449 = vsub.s32 1, %v448
        %v450 = vrot.slane %v441, %v449
        %v451 = vlaneseq
        %v452 = vshrl.u32 %v451, 7
        %v453 = vsub.s32 2, %v452
        %v454 = vrot.slane %v441, %v453
        %v455 = vlaneseq
        %v456 = vshrl.u32 %v455, 7
        %v457 = vsub.s32 3, %v456
        %v458 = vrot.slane %v441, %v457
        %463 = vmatprep.subr.mxu0 %v314
        %464 = vmatpush1.msra.mxu0 %v313
        %465 = vmatprep.subr.mxu0 %v318
        %466 = vmatpush1.msra.mxu0 %v317
        %467 = vmatprep.subr.mxu0 %v322
        %468 = vmatpush1.msra.mxu0 %v321
        %469 = vmatprep.subr.mxu0 %v326
        %470 = vmatpush1.msra.mxu0 %v325
        %471 = vmatprep.subr.mxu0 %v330
        %472 = vmatpush1.msra.mxu0 %v329
        %473 = vmatprep.subr.mxu0 %v334
        %474 = vmatpush1.msra.mxu0 %v333
        %475 = vmatprep.subr.mxu0 %v338
        %476 = vmatpush1.msra.mxu0 %v337
        %477 = vmatprep.subr.mxu0 %v342
        %478 = vmatpush1.msra.mxu0 %v341
        %479 = vmatprep.subr.mxu0 %v346
        %480 = vmatpush1.msra.mxu0 %v345
        %481 = vmatprep.subr.mxu0 %v350
        %482 = vmatpush1.msra.mxu0 %v349
        %483 = vmatprep.subr.mxu0 %v354
        %484 = vmatpush1.msra.mxu0 %v353
        %485 = vmatprep.subr.mxu0 %v358
        %486 = vmatpush1.msra.mxu0 %v357
        %487 = vmatprep.subr.mxu0 %v362
        %488 = vmatpush1.msra.mxu0 %v361
        %489 = vmatprep.subr.mxu0 %v366
        %490 = vmatpush1.msra.mxu0 %v365
        %491 = vmatprep.subr.mxu0 %v370
        %492 = vmatpush1.msra.mxu0 %v369
        %493 = vmatprep.subr.mxu0 %v374
        %494 = vmatpush1.msra.mxu0 %v373
        %495 = vmatprep.subr.mxu0 %v378
        %496 = vmatpush1.msra.mxu0 %v377
        %497 = vmatprep.subr.mxu0 %v382
        %498 = vmatpush1.msra.mxu0 %v381
        %499 = vmatprep.subr.mxu0 %v386
        %500 = vmatpush1.msra.mxu0 %v385
        %501 = vmatprep.subr.mxu0 %v390
        %502 = vmatpush1.msra.mxu0 %v389
        %503 = vmatprep.subr.mxu0 %v394
        %504 = vmatpush1.msra.mxu0 %v393
        %505 = vmatprep.subr.mxu0 %v398
        %506 = vmatpush1.msra.mxu0 %v397
        %507 = vmatprep.subr.mxu0 %v402
        %508 = vmatpush1.msra.mxu0 %v401
        %509 = vmatprep.subr.mxu0 %v406
        %510 = vmatpush1.msra.mxu0 %v405
        %511 = vmatprep.subr.mxu0 %v410
        %512 = vmatpush1.msra.mxu0 %v409
        %513 = vmatprep.subr.mxu0 %v414
        %514 = vmatpush1.msra.mxu0 %v413
        %515 = vmatprep.subr.mxu0 %v418
        %516 = vmatpush1.msra.mxu0 %v417
        %517 = vmatprep.subr.mxu0 %v422
        %518 = vmatpush1.msra.mxu0 %v421
        %519 = vmatprep.subr.mxu0 %v426
        %520 = vmatpush1.msra.mxu0 %v425
        %521 = vmatprep.subr.mxu0 %v430
        %522 = vmatpush1.msra.mxu0 %v429
        %523 = vmatprep.subr.mxu0 %v434
        %524 = vmatpush1.msra.mxu0 %v433
        %525 = vmatprep.subr.mxu0 %v438
        %526 = vmatpush1.msra.mxu0 %v437
        %527 = vmatprep.mubr.f32.mxu0 %v310
        %528 = vmatmul.mubr.f32.gmra.mrb[0].mxu0 %v312
        %v529 = vpop.f32.mrb[0].mxu0
        %v530 = vadd.f32 %v446, %v529
        %v531 = vpop.f32.mrb[0].mxu0
        %v532 = vadd.f32 %v450, %v531
        %533 = vdwg.mxu0
        %534 = vmatprep.subr.mxu0 %v316
        %535 = vmatpush1.msra.mxu0 %v315
        %536 = vmatprep.subr.mxu0 %v320
        %537 = vmatpush1.msra.mxu0 %v319
        %538 = vmatprep.subr.mxu0 %v324
        %539 = vmatpush1.msra.mxu0 %v323
        %540 = vmatprep.subr.mxu0 %v328
        %541 = vmatpush1.msra.mxu0 %v327
        %542 = vmatprep.subr.mxu0 %v332
        %543 = vmatpush1.msra.mxu0 %v331
        %544 = vmatprep.subr.mxu0 %v336
        %545 = vmatpush1.msra.mxu0 %v335
        %546 = vmatprep.subr.mxu0 %v340
        %547 = vmatpush1.msra.mxu0 %v339
        %548 = vmatprep.subr.mxu0 %v344
        %549 = vmatpush1.msra.mxu0 %v343
        %550 = vmatprep.subr.mxu0 %v348
        %551 = vmatpush1.msra.mxu0 %v347
        %552 = vmatprep.subr.mxu0 %v352
        %553 = vmatpush1.msra.mxu0 %v351
        %554 = vmatprep.subr.mxu0 %v356
        %555 = vmatpush1.msra.mxu0 %v355
        %556 = vmatprep.subr.mxu0 %v360
        %557 = vmatpush1.msra.mxu0 %v359
        %558 = vmatprep.subr.mxu0 %v364
        %559 = vmatpush1.msra.mxu0 %v363
        %560 = vmatprep.subr.mxu0 %v368
        %561 = vmatpush1.msra.mxu0 %v367
        %562 = vmatprep.subr.mxu0 %v372
        %563 = vmatpush1.msra.mxu0 %v371
        %564 = vmatprep.subr.mxu0 %v376
        %565 = vmatpush1.msra.mxu0 %v375
        %566 = vmatprep.subr.mxu0 %v380
        %567 = vmatpush1.msra.mxu0 %v379
        %568 = vmatprep.subr.mxu0 %v384
        %569 = vmatpush1.msra.mxu0 %v383
        %570 = vmatprep.subr.mxu0 %v388
        %571 = vmatpush1.msra.mxu0 %v387
        %572 = vmatprep.subr.mxu0 %v392
        %573 = vmatpush1.msra.mxu0 %v391
        %574 = vmatprep.subr.mxu0 %v396
        %575 = vmatpush1.msra.mxu0 %v395
        %576 = vmatprep.subr.mxu0 %v400
        %577 = vmatpush1.msra.mxu0 %v399
        %578 = vmatprep.subr.mxu0 %v404
        %579 = vmatpush1.msra.mxu0 %v403
        %580 = vmatprep.subr.mxu0 %v408
        %581 = vmatpush1.msra.mxu0 %v407
        %582 = vmatprep.subr.mxu0 %v412
        %583 = vmatpush1.msra.mxu0 %v411
        %584 = vmatprep.subr.mxu0 %v416
        %585 = vmatpush1.msra.mxu0 %v415
        %586 = vmatprep.subr.mxu0 %v420
        %587 = vmatpush1.msra.mxu0 %v419
        %588 = vmatprep.subr.mxu0 %v424
        %589 = vmatpush1.msra.mxu0 %v423
        %590 = vmatprep.subr.mxu0 %v428
        %591 = vmatpush1.msra.mxu0 %v427
        %592 = vmatprep.subr.mxu0 %v432
        %593 = vmatpush1.msra.mxu0 %v431
        %594 = vmatprep.subr.mxu0 %v436
        %595 = vmatpush1.msra.mxu0 %v435
        %596 = vmatprep.subr.mxu0 %v440
        %597 = vmatpush1.msra.mxu0 %v439
        %598 = vmatprep.mubr.f32.mxu0 %v310
        %599 = vmatmul.mubr.f32.gmra.mrb[0].mxu0 %v312
        %v600 = vpop.f32.mrb[0].mxu0
        %v601 = vadd.f32 %v454, %v600
        %v602 = vpop.f32.mrb[0].mxu0
        %v603 = vadd.f32 %v458, %v602
        %604 = vdwg.mxu0
        %v605 = vxor.u32 %v530, 2147483648
        %v606 = vmul.f32 %v605, 1.442695
        %v607 = vpow.pop %v606
        %v608 = vadd.f32 %v607, 1.0
        %v609 = vrcp.pop %v608
        %v610 = vmul.f32 1.0, %v609
        %v611 = vxor.u32 %v532, 2147483648
        %v612 = vmul.f32 %v611, 1.442695
        %v613 = vpow.pop %v612
        %v614 = vadd.f32 %v613, 1.0
        %v615 = vrcp.pop %v614
        %v616 = vmul.f32 1.0, %v615
        %v617 = vtanh.pop %v601
        %v618 = vxor.u32 %v603, 2147483648
        %v619 = vmul.f32 %v618, 1.442695
        %v620 = vpow.pop %v619
        %v621 = vadd.f32 %v620, 1.0
        %v622 = vrcp.pop %v621
        %v623 = vmul.f32 1.0, %v622
        %v624 = vmul.f32 %v616, %v311
        %v625 = vmul.f32 %v610, %v617
        %v626 = vadd.f32 %v624, %v625
        %v627 = vtanh.pop %v626
        %v628 = vmul.f32 %v623, %v627
        %v629 = vld [vmem:[#allocation10] sm:$0xff]
        %v630 = vld [vmem:[#allocation10 + $0x8] sm:$0xff]
        %v631 = vld [vmem:[#allocation10 + $0x10] sm:$0xff]
        %v632 = vld [vmem:[#allocation10 + $0x18] sm:$0xff]
        %v633 = vld [vmem:[#allocation10 + $0x20] sm:$0xff]
        %v634 = vld [vmem:[#allocation10 + $0x28] sm:$0xff]
        %v635 = vld [vmem:[#allocation10 + $0x30] sm:$0xff]
        %v636 = vld [vmem:[#allocation10 + $0x38] sm:$0xff]
        %v637 = vld [vmem:[#allocation10 + $0x40] sm:$0xff]
        %v638 = vld [vmem:[#allocation10 + $0x48] sm:$0xff]
        %v639 = vld [vmem:[#allocation10 + $0x50] sm:$0xff]
        %v640 = vld [vmem:[#allocation10 + $0x58] sm:$0xff]
        %v641 = vld [vmem:[#allocation10 + $0x60] sm:$0xff]
        %v642 = vld [vmem:[#allocation10 + $0x68] sm:$0xff]
        %v643 = vld [vmem:[#allocation10 + $0x70] sm:$0xff]
        %v644 = vld [vmem:[#allocation10 + $0x78] sm:$0xff]
        %v645 = vld [vmem:[%s4] sm:$0x1]
        %v647 = vlaneseq
        %v648 = vshrl.u32 %v647, 7
        %v649 = vsub.s32 0, %v648
        %v650 = vrot.slane %v645, %v649
        %652 = vmatprep.subr.mxu0 0.0
        %653 = vmatpush1.msra.mxu0 %v629
        %654 = vmatprep.subr.mxu0 0.0
        %655 = vmatpush1.msra.mxu0 %v630
        %656 = vmatprep.subr.mxu0 0.0
        %657 = vmatpush1.msra.mxu0 %v631
        %658 = vmatprep.subr.mxu0 0.0
        %659 = vmatpush1.msra.mxu0 %v632
        %660 = vmatprep.subr.mxu0 0.0
        %661 = vmatpush1.msra.mxu0 %v633
        %662 = vmatprep.subr.mxu0 0.0
        %663 = vmatpush1.msra.mxu0 %v634
        %664 = vmatprep.subr.mxu0 0.0
        %665 = vmatpush1.msra.mxu0 %v635
        %666 = vmatprep.subr.mxu0 0.0
        %667 = vmatpush1.msra.mxu0 %v636
        %668 = vmatprep.subr.mxu0 0.0
        %669 = vmatpush1.msra.mxu0 %v637
        %670 = vmatprep.subr.mxu0 0.0
        %671 = vmatpush1.msra.mxu0 %v638
        %672 = vmatprep.subr.mxu0 0.0
        %673 = vmatpush1.msra.mxu0 %v639
        %674 = vmatprep.subr.mxu0 0.0
        %675 = vmatpush1.msra.mxu0 %v640
        %676 = vmatprep.subr.mxu0 0.0
        %677 = vmatpush1.msra.mxu0 %v641
        %678 = vmatprep.subr.mxu0 0.0
        %679 = vmatpush1.msra.mxu0 %v642
        %680 = vmatprep.subr.mxu0 0.0
        %681 = vmatpush1.msra.mxu0 %v643
        %682 = vmatprep.subr.mxu0 0.0
        %683 = vmatpush1.msra.mxu0 %v644
        %684 = vmatprep.subr.mxu0 0.0
        %685 = vmatpush1.msra.mxu0 0.0
        %686 = vmatprep.subr.mxu0 0.0
        %687 = vmatpush1.msra.mxu0 0.0
        %688 = vmatprep.subr.mxu0 0.0
        %689 = vmatpush1.msra.mxu0 0.0
        %690 = vmatprep.subr.mxu0 0.0
        %691 = vmatpush1.msra.mxu0 0.0
        %692 = vmatprep.subr.mxu0 0.0
        %693 = vmatpush1.msra.mxu0 0.0
        %694 = vmatprep.subr.mxu0 0.0
        %695 = vmatpush1.msra.mxu0 0.0
        %696 = vmatprep.subr.mxu0 0.0
        %697 = vmatpush1.msra.mxu0 0.0
        %698 = vmatprep.subr.mxu0 0.0
        %699 = vmatpush1.msra.mxu0 0.0
        %700 = vmatprep.subr.mxu0 0.0
        %701 = vmatpush1.msra.mxu0 0.0
        %702 = vmatprep.subr.mxu0 0.0
        %703 = vmatpush1.msra.mxu0 0.0
        %704 = vmatprep.subr.mxu0 0.0
        %705 = vmatpush1.msra.mxu0 0.0
        %706 = vmatprep.subr.mxu0 0.0
        %707 = vmatpush1.msra.mxu0 0.0
        %708 = vmatprep.subr.mxu0 0.0
        %709 = vmatpush1.msra.mxu0 0.0
        %710 = vmatprep.subr.mxu0 0.0
        %711 = vmatpush1.msra.mxu0 0.0
        %712 = vmatprep.subr.mxu0 0.0
        %713 = vmatpush1.msra.mxu0 0.0
        %714 = vmatprep.subr.mxu0 0.0
        %715 = vmatpush1.msra.mxu0 0.0
        %716 = vmatprep.mubr.f32.mxu0 0.0
        %717 = vmatmul.mubr.f32.gmra.mrb[0].mxu0 %v628
        %v718 = vpop.f32.mrb[0].mxu0
        %v719 = vadd.f32 %v650, %v718
        %v720 = vpop.f32.mrb[0].mxu0
        %721 = vdwg.mxu0
        %722 = vmax.xlane.f32.xlu0 %v719
        %v723 = vpop.xlane.xlu0 %722
        %v724 = vsub.f32 %v719, %v723
        %v725 = vmul.f32 %v724, 1.442695
        %v726 = vpow.pop %v725
        %727 = vadd.xlane.f32.xlu0 %v726
        %v728 = vpop.xlane.xlu0 %727
        %v729 = vlog2.pop %v728
        %v730 = vmul.f32 %v729, 0.6931472
        %v731 = vadd.f32 %v723, %v730
        %v732 = vsub.f32 %v719, %v731
        %733 = vst [vmem:[%s290] sm:$0xff] %v732
        %vm734 = vcmp.eq.f32.partialorder %v719, %v723
        %v735 = vsel %vm734, %v297, 128
        %v736 = vand.u32 %v735, 65535
        %v737 = vshra.s32 %v735, 16
        %v738 = vcvt.s32.f32 %v736
        %v739 = vcvt.s32.f32 %v737
        %740 = vmin.xlane.f32.xlu0 %v739
        %v741 = vpop.xlane.xlu0 %740
        %vm742 = vcmp.eq.f32.partialorder %v739, %v741
        %v743 = vsel %vm742, %v738, inf
        %744 = vmin.xlane.f32.xlu0 %v743
        %v745 = vpop.xlane.xlu0 %744
        %v746 = vcvt.f32.s32 %v745
        %v747 = vcvt.f32.s32 %v741
        %v748 = vshll.u32 %v747, 16
        %v749 = vadd.s32 %v748, %v746
        %vm750 = vcmp.eq.s32.totalorder %v297, %v749
        %v751 = vsel %vm750, 1, 0
        %v752 = vcvt.s32.f32 %v751
        %p753 = scmp.lt.s32.totalorder %s309, 10
        %s754 = scalar_select %p753, 1, 0
        %v755 = vstv %s754
        %vm756 = vcmp.eq.s32.totalorder %v755, 1
        %v757 = vsel %vm756, %v628, %v310
        %v758 = vsel %vm756, %v626, %v311
        %v759 = vld [vmem:[#allocation8] sm:$0xff]
        %v760 = vld [vmem:[#allocation8 + $0x8] sm:$0xff]
        %v761 = vld [vmem:[#allocation8 + $0x10] sm:$0xff]
        %v762 = vld [vmem:[#allocation8 + $0x18] sm:$0xff]
        %v763 = vld [vmem:[#allocation8 + $0x20] sm:$0xff]
        %v764 = vld [vmem:[#allocation8 + $0x28] sm:$0xff]
        %v765 = vld [vmem:[#allocation8 + $0x30] sm:$0xff]
        %v766 = vld [vmem:[#allocation8 + $0x38] sm:$0xff]
        %v767 = vld [vmem:[#allocation8 + $0x40] sm:$0xff]
        %v768 = vld [vmem:[#allocation8 + $0x48] sm:$0xff]
        %v769 = vld [vmem:[#allocation8 + $0x50] sm:$0xff]
        %v770 = vld [vmem:[#allocation8 + $0x58] sm:$0xff]
        %v771 = vld [vmem:[#allocation8 + $0x60] sm:$0xff]
        %v772 = vld [vmem:[#allocation8 + $0x68] sm:$0xff]
        %v773 = vld [vmem:[#allocation8 + $0x70] sm:$0xff]
        %v774 = vld [vmem:[#allocation8 + $0x78] sm:$0xff]
        %v775 = vld [vmem:[#allocation8 + $0x80] sm:$0xff]
        %v776 = vld [vmem:[#allocation8 + $0x88] sm:$0xff]
        %v777 = vld [vmem:[#allocation8 + $0x90] sm:$0xff]
        %v778 = vld [vmem:[#allocation8 + $0x98] sm:$0xff]
        %v779 = vld [vmem:[#allocation8 + $0xa0] sm:$0xff]
        %v780 = vld [vmem:[#allocation8 + $0xa8] sm:$0xff]
        %v781 = vld [vmem:[#allocation8 + $0xb0] sm:$0xff]
        %v782 = vld [vmem:[#allocation8 + $0xb8] sm:$0xff]
        %v783 = vld [vmem:[#allocation8 + $0xc0] sm:$0xff]
        %v784 = vld [vmem:[#allocation8 + $0xc8] sm:$0xff]
        %v785 = vld [vmem:[#allocation8 + $0xd0] sm:$0xff]
        %v786 = vld [vmem:[#allocation8 + $0xd8] sm:$0xff]
        %v787 = vld [vmem:[#allocation8 + $0xe0] sm:$0xff]
        %v788 = vld [vmem:[#allocation8 + $0xe8] sm:$0xff]
        %v789 = vld [vmem:[#allocation8 + $0xf0] sm:$0xff]
        %v790 = vld [vmem:[#allocation8 + $0xf8] sm:$0xff]
        %v791 = vld [vmem:[#allocation8 + $0x100] sm:$0xff]
        %v792 = vld [vmem:[#allocation8 + $0x108] sm:$0xff]
        %v793 = vld [vmem:[#allocation8 + $0x110] sm:$0xff]
        %v794 = vld [vmem:[#allocation8 + $0x118] sm:$0xff]
        %v795 = vld [vmem:[#allocation8 + $0x120] sm:$0xff]
        %v796 = vld [vmem:[#allocation8 + $0x128] sm:$0xff]
        %v797 = vld [vmem:[#allocation8 + $0x130] sm:$0xff]
        %v798 = vld [vmem:[#allocation8 + $0x138] sm:$0xff]
        %v799 = vld [vmem:[#allocation8 + $0x140] sm:$0xff]
        %v800 = vld [vmem:[#allocation8 + $0x148] sm:$0xff]
        %v801 = vld [vmem:[#allocation8 + $0x150] sm:$0xff]
        %v802 = vld [vmem:[#allocation8 + $0x158] sm:$0xff]
        %v803 = vld [vmem:[#allocation8 + $0x160] sm:$0xff]
        %v804 = vld [vmem:[#allocation8 + $0x168] sm:$0xff]
        %v805 = vld [vmem:[#allocation8 + $0x170] sm:$0xff]
        %v806 = vld [vmem:[#allocation8 + $0x178] sm:$0xff]
        %v807 = vld [vmem:[#allocation8 + $0x180] sm:$0xff]
        %v808 = vld [vmem:[#allocation8 + $0x188] sm:$0xff]
        %v809 = vld [vmem:[#allocation8 + $0x190] sm:$0xff]
        %v810 = vld [vmem:[#allocation8 + $0x198] sm:$0xff]
        %v811 = vld [vmem:[#allocation8 + $0x1a0] sm:$0xff]
        %v812 = vld [vmem:[#allocation8 + $0x1a8] sm:$0xff]
        %v813 = vld [vmem:[#allocation8 + $0x1b0] sm:$0xff]
        %v814 = vld [vmem:[#allocation8 + $0x1b8] sm:$0xff]
        %v815 = vld [vmem:[#allocation8 + $0x1c0] sm:$0xff]
        %v816 = vld [vmem:[#allocation8 + $0x1c8] sm:$0xff]
        %v817 = vld [vmem:[#allocation8 + $0x1d0] sm:$0xff]
        %v818 = vld [vmem:[#allocation8 + $0x1d8] sm:$0xff]
        %v819 = vld [vmem:[#allocation8 + $0x1e0] sm:$0xff]
        %v820 = vld [vmem:[#allocation8 + $0x1e8] sm:$0xff]
        %v821 = vld [vmem:[#allocation8 + $0x1f0] sm:$0xff]
        %v822 = vld [vmem:[#allocation8 + $0x1f8] sm:$0xff]
        %v823 = vld [vmem:[#allocation8 + $0x200] sm:$0xff]
        %v824 = vld [vmem:[#allocation8 + $0x208] sm:$0xff]
        %v825 = vld [vmem:[#allocation8 + $0x210] sm:$0xff]
        %v826 = vld [vmem:[#allocation8 + $0x218] sm:$0xff]
        %v827 = vld [vmem:[#allocation8 + $0x220] sm:$0xff]
        %v828 = vld [vmem:[#allocation8 + $0x228] sm:$0xff]
        %v829 = vld [vmem:[#allocation8 + $0x230] sm:$0xff]
        %v830 = vld [vmem:[#allocation8 + $0x238] sm:$0xff]
        %v831 = vld [vmem:[#allocation8 + $0x240] sm:$0xff]
        %v832 = vld [vmem:[#allocation8 + $0x248] sm:$0xff]
        %v833 = vld [vmem:[#allocation8 + $0x250] sm:$0xff]
        %v834 = vld [vmem:[#allocation8 + $0x258] sm:$0xff]
        %v835 = vld [vmem:[#allocation8 + $0x260] sm:$0xff]
        %v836 = vld [vmem:[#allocation8 + $0x268] sm:$0xff]
        %v837 = vld [vmem:[#allocation8 + $0x270] sm:$0xff]
        %v838 = vld [vmem:[#allocation8 + $0x278] sm:$0xff]
        %v839 = vld [vmem:[#allocation8 + $0x280] sm:$0xff]
        %v840 = vld [vmem:[#allocation8 + $0x288] sm:$0xff]
        %v841 = vld [vmem:[#allocation8 + $0x290] sm:$0xff]
        %v842 = vld [vmem:[#allocation8 + $0x298] sm:$0xff]
        %v843 = vld [vmem:[#allocation8 + $0x2a0] sm:$0xff]
        %v844 = vld [vmem:[#allocation8 + $0x2a8] sm:$0xff]
        %v845 = vld [vmem:[#allocation8 + $0x2b0] sm:$0xff]
        %v846 = vld [vmem:[#allocation8 + $0x2b8] sm:$0xff]
        %v847 = vld [vmem:[#allocation8 + $0x2c0] sm:$0xff]
        %v848 = vld [vmem:[#allocation8 + $0x2c8] sm:$0xff]
        %v849 = vld [vmem:[#allocation8 + $0x2d0] sm:$0xff]
        %v850 = vld [vmem:[#allocation8 + $0x2d8] sm:$0xff]
        %v851 = vld [vmem:[#allocation8 + $0x2e0] sm:$0xff]
        %v852 = vld [vmem:[#allocation8 + $0x2e8] sm:$0xff]
        %v853 = vld [vmem:[#allocation8 + $0x2f0] sm:$0xff]
        %v854 = vld [vmem:[#allocation8 + $0x2f8] sm:$0xff]
        %v855 = vld [vmem:[#allocation8 + $0x300] sm:$0xff]
        %v856 = vld [vmem:[#allocation8 + $0x308] sm:$0xff]
        %v857 = vld [vmem:[#allocation8 + $0x310] sm:$0xff]
        %v858 = vld [vmem:[#allocation8 + $0x318] sm:$0xff]
        %v859 = vld [vmem:[#allocation8 + $0x320] sm:$0xff]
        %v860 = vld [vmem:[#allocation8 + $0x328] sm:$0xff]
        %v861 = vld [vmem:[#allocation8 + $0x330] sm:$0xff]
        %v862 = vld [vmem:[#allocation8 + $0x338] sm:$0xff]
        %v863 = vld [vmem:[#allocation8 + $0x340] sm:$0xff]
        %v864 = vld [vmem:[#allocation8 + $0x348] sm:$0xff]
        %v865 = vld [vmem:[#allocation8 + $0x350] sm:$0xff]
        %v866 = vld [vmem:[#allocation8 + $0x358] sm:$0xff]
        %v867 = vld [vmem:[#allocation8 + $0x360] sm:$0xff]
        %v868 = vld [vmem:[#allocation8 + $0x368] sm:$0xff]
        %v869 = vld [vmem:[#allocation8 + $0x370] sm:$0xff]
        %v870 = vld [vmem:[#allocation8 + $0x378] sm:$0xff]
        %v871 = vld [vmem:[#allocation8 + $0x380] sm:$0xff]
        %v872 = vld [vmem:[#allocation8 + $0x388] sm:$0xff]
        %v873 = vld [vmem:[#allocation8 + $0x390] sm:$0xff]
        %v874 = vld [vmem:[#allocation8 + $0x398] sm:$0xff]
        %v875 = vld [vmem:[#allocation8 + $0x3a0] sm:$0xff]
        %v876 = vld [vmem:[#allocation8 + $0x3a8] sm:$0xff]
        %v877 = vld [vmem:[#allocation8 + $0x3b0] sm:$0xff]
        %v878 = vld [vmem:[#allocation8 + $0x3b8] sm:$0xff]
        %v879 = vld [vmem:[#allocation8 + $0x3c0] sm:$0xff]
        %v880 = vld [vmem:[#allocation8 + $0x3c8] sm:$0xff]
        %v881 = vld [vmem:[#allocation8 + $0x3d0] sm:$0xff]
        %v882 = vld [vmem:[#allocation8 + $0x3d8] sm:$0xff]
        %v883 = vld [vmem:[#allocation8 + $0x3e0] sm:$0xff]
        %v884 = vld [vmem:[#allocation8 + $0x3e8] sm:$0xff]
        %v885 = vld [vmem:[#allocation8 + $0x3f0] sm:$0xff]
        %v886 = vld [vmem:[#allocation8 + $0x3f8] sm:$0xff]
        %v887 = vld [vmem:[%s2] sm:$0xf]
        %v889 = vlaneseq
        %v890 = vshrl.u32 %v889, 7
        %v891 = vsub.s32 0, %v890
        %v892 = vrot.slane %v887, %v891
        %v893 = vlaneseq
        %v894 = vshrl.u32 %v893, 7
        %v895 = vsub.s32 1, %v894
        %v896 = vrot.slane %v887, %v895
        %v897 = vlaneseq
        %v898 = vshrl.u32 %v897, 7
        %v899 = vsub.s32 2, %v898
        %v900 = vrot.slane %v887, %v899
        %v901 = vlaneseq
        %v902 = vshrl.u32 %v901, 7
        %v903 = vsub.s32 3, %v902
        %v904 = vrot.slane %v887, %v903
        %909 = vmatprep.subr.mxu0 %v760
        %910 = vmatpush1.msra.mxu0 %v759
        %911 = vmatprep.subr.mxu0 %v764
        %912 = vmatpush1.msra.mxu0 %v763
        %913 = vmatprep.subr.mxu0 %v768
        %914 = vmatpush1.msra.mxu0 %v767
        %915 = vmatprep.subr.mxu0 %v772
        %916 = vmatpush1.msra.mxu0 %v771
        %917 = vmatprep.subr.mxu0 %v776
        %918 = vmatpush1.msra.mxu0 %v775
        %919 = vmatprep.subr.mxu0 %v780
        %920 = vmatpush1.msra.mxu0 %v779
        %921 = vmatprep.subr.mxu0 %v784
        %922 = vmatpush1.msra.mxu0 %v783
        %923 = vmatprep.subr.mxu0 %v788
        %924 = vmatpush1.msra.mxu0 %v787
        %925 = vmatprep.subr.mxu0 %v792
        %926 = vmatpush1.msra.mxu0 %v791
        %927 = vmatprep.subr.mxu0 %v796
        %928 = vmatpush1.msra.mxu0 %v795
        %929 = vmatprep.subr.mxu0 %v800
        %930 = vmatpush1.msra.mxu0 %v799
        %931 = vmatprep.subr.mxu0 %v804
        %932 = vmatpush1.msra.mxu0 %v803
        %933 = vmatprep.subr.mxu0 %v808
        %934 = vmatpush1.msra.mxu0 %v807
        %935 = vmatprep.subr.mxu0 %v812
        %936 = vmatpush1.msra.mxu0 %v811
        %937 = vmatprep.subr.mxu0 %v816
        %938 = vmatpush1.msra.mxu0 %v815
        %939 = vmatprep.subr.mxu0 %v820
        %940 = vmatpush1.msra.mxu0 %v819
        %941 = vmatprep.subr.mxu0 %v824
        %942 = vmatpush1.msra.mxu0 %v823
        %943 = vmatprep.subr.mxu0 %v828
        %944 = vmatpush1.msra.mxu0 %v827
        %945 = vmatprep.subr.mxu0 %v832
        %946 = vmatpush1.msra.mxu0 %v831
        %947 = vmatprep.subr.mxu0 %v836
        %948 = vmatpush1.msra.mxu0 %v835
        %949 = vmatprep.subr.mxu0 %v840
        %950 = vmatpush1.msra.mxu0 %v839
        %951 = vmatprep.subr.mxu0 %v844
        %952 = vmatpush1.msra.mxu0 %v843
        %953 = vmatprep.subr.mxu0 %v848
        %954 = vmatpush1.msra.mxu0 %v847
        %955 = vmatprep.subr.mxu0 %v852
        %956 = vmatpush1.msra.mxu0 %v851
        %957 = vmatprep.subr.mxu0 %v856
        %958 = vmatpush1.msra.mxu0 %v855
        %959 = vmatprep.subr.mxu0 %v860
        %960 = vmatpush1.msra.mxu0 %v859
        %961 = vmatprep.subr.mxu0 %v864
        %962 = vmatpush1.msra.mxu0 %v863
        %963 = vmatprep.subr.mxu0 %v868
        %964 = vmatpush1.msra.mxu0 %v867
        %965 = vmatprep.subr.mxu0 %v872
        %966 = vmatpush1.msra.mxu0 %v871
        %967 = vmatprep.subr.mxu0 %v876
        %968 = vmatpush1.msra.mxu0 %v875
        %969 = vmatprep.subr.mxu0 %v880
        %970 = vmatpush1.msra.mxu0 %v879
        %971 = vmatprep.subr.mxu0 %v884
        %972 = vmatpush1.msra.mxu0 %v883
        %973 = vmatprep.mubr.f32.mxu0 %v757
        %974 = vmatmul.mubr.f32.gmra.mrb[0].mxu0 %v752
        %v975 = vpop.f32.mrb[0].mxu0
        %v976 = vadd.f32 %v892, %v975
        %v977 = vpop.f32.mrb[0].mxu0
        %v978 = vadd.f32 %v896, %v977
        %979 = vdwg.mxu0
        %980 = vmatprep.subr.mxu0 %v762
        %981 = vmatpush1.msra.mxu0 %v761
        %982 = vmatprep.subr.mxu0 %v766
        %983 = vmatpush1.msra.mxu0 %v765
        %984 = vmatprep.subr.mxu0 %v770
        %985 = vmatpush1.msra.mxu0 %v769
        %986 = vmatprep.subr.mxu0 %v774
        %987 = vmatpush1.msra.mxu0 %v773
        %988 = vmatprep.subr.mxu0 %v778
        %989 = vmatpush1.msra.mxu0 %v777
        %990 = vmatprep.subr.mxu0 %v782
        %991 = vmatpush1.msra.mxu0 %v781
        %992 = vmatprep.subr.mxu0 %v786
        %993 = vmatpush1.msra.mxu0 %v785
        %994 = vmatprep.subr.mxu0 %v790
        %995 = vmatpush1.msra.mxu0 %v789
        %996 = vmatprep.subr.mxu0 %v794
        %997 = vmatpush1.msra.mxu0 %v793
        %998 = vmatprep.subr.mxu0 %v798
        %999 = vmatpush1.msra.mxu0 %v797
        %1000 = vmatprep.subr.mxu0 %v802
        %1001 = vmatpush1.msra.mxu0 %v801
        %1002 = vmatprep.subr.mxu0 %v806
        %1003 = vmatpush1.msra.mxu0 %v805
        %1004 = vmatprep.subr.mxu0 %v810
        %1005 = vmatpush1.msra.mxu0 %v809
        %1006 = vmatprep.subr.mxu0 %v814
        %1007 = vmatpush1.msra.mxu0 %v813
        %1008 = vmatprep.subr.mxu0 %v818
        %1009 = vmatpush1.msra.mxu0 %v817
        %1010 = vmatprep.subr.mxu0 %v822
        %1011 = vmatpush1.msra.mxu0 %v821
        %1012 = vmatprep.subr.mxu0 %v826
        %1013 = vmatpush1.msra.mxu0 %v825
        %1014 = vmatprep.subr.mxu0 %v830
        %1015 = vmatpush1.msra.mxu0 %v829
        %1016 = vmatprep.subr.mxu0 %v834
        %1017 = vmatpush1.msra.mxu0 %v833
        %1018 = vmatprep.subr.mxu0 %v838
        %1019 = vmatpush1.msra.mxu0 %v837
        %1020 = vmatprep.subr.mxu0 %v842
        %1021 = vmatpush1.msra.mxu0 %v841
        %1022 = vmatprep.subr.mxu0 %v846
        %1023 = vmatpush1.msra.mxu0 %v845
        %1024 = vmatprep.subr.mxu0 %v850
        %1025 = vmatpush1.msra.mxu0 %v849
        %1026 = vmatprep.subr.mxu0 %v854
        %1027 = vmatpush1.msra.mxu0 %v853
        %1028 = vmatprep.subr.mxu0 %v858
        %1029 = vmatpush1.msra.mxu0 %v857
        %1030 = vmatprep.subr.mxu0 %v862
        %1031 = vmatpush1.msra.mxu0 %v861
        %1032 = vmatprep.subr.mxu0 %v866
        %1033 = vmatpush1.msra.mxu0 %v865
        %1034 = vmatprep.subr.mxu0 %v870
        %1035 = vmatpush1.msra.mxu0 %v869
        %1036 = vmatprep.subr.mxu0 %v874
        %1037 = vmatpush1.msra.mxu0 %v873
        %1038 = vmatprep.subr.mxu0 %v878
        %1039 = vmatpush1.msra.mxu0 %v877
        %1040 = vmatprep.subr.mxu0 %v882
        %1041 = vmatpush1.msra.mxu0 %v881
        %1042 = vmatprep.subr.mxu0 %v886
        %1043 = vmatpush1.msra.mxu0 %v885
        %1044 = vmatprep.mubr.f32.mxu0 %v757
        %1045 = vmatmul.mubr.f32.gmra.mrb[0].mxu0 %v752
        %v1046 = vpop.f32.mrb[0].mxu0
        %v1047 = vadd.f32 %v900, %v1046
        %v1048 = vpop.f32.mrb[0].mxu0
        %v1049 = vadd.f32 %v904, %v1048
        %1050 = vdwg.mxu0
        %v1051 = vxor.u32 %v976, 2147483648
        %v1052 = vmul.f32 %v1051, 1.442695
        %v1053 = vpow.pop %v1052
        %v1054 = vadd.f32 %v1053, 1.0
        %v1055 = vrcp.pop %v1054
        %v1056 = vmul.f32 1.0, %v1055
        %v1057 = vxor.u32 %v978, 2147483648
        %v1058 = vmul.f32 %v1057, 1.442695
        %v1059 = vpow.pop %v1058
        %v1060 = vadd.f32 %v1059, 1.0
        %v1061 = vrcp.pop %v1060
        %v1062 = vmul.f32 1.0, %v1061
        %v1063 = vtanh.pop %v1047
        %v1064 = vxor.u32 %v1049, 2147483648
        %v1065 = vmul.f32 %v1064, 1.442695
        %v1066 = vpow.pop %v1065
        %v1067 = vadd.f32 %v1066, 1.0
        %v1068 = vrcp.pop %v1067
        %v1069 = vmul.f32 1.0, %v1068
        %v1070 = vmul.f32 %v1062, %v758
        %v1071 = vmul.f32 %v1056, %v1063
        %v1072 = vadd.f32 %v1070, %v1071
        %v1073 = vtanh.pop %v1072
        %v1074 = vmul.f32 %v1069, %v1073
        %v1075 = vld [vmem:[#allocation10] sm:$0xff]
        %v1076 = vld [vmem:[#allocation10 + $0x8] sm:$0xff]
        %v1077 = vld [vmem:[#allocation10 + $0x10] sm:$0xff]
        %v1078 = vld [vmem:[#allocation10 + $0x18] sm:$0xff]
        %v1079 = vld [vmem:[#allocation10 + $0x20] sm:$0xff]
        %v1080 = vld [vmem:[#allocation10 + $0x28] sm:$0xff]
        %v1081 = vld [vmem:[#allocation10 + $0x30] sm:$0xff]
        %v1082 = vld [vmem:[#allocation10 + $0x38] sm:$0xff]
        %v1083 = vld [vmem:[#allocation10 + $0x40] sm:$0xff]
        %v1084 = vld [vmem:[#allocation10 + $0x48] sm:$0xff]
        %v1085 = vld [vmem:[#allocation10 + $0x50] sm:$0xff]
        %v1086 = vld [vmem:[#allocation10 + $0x58] sm:$0xff]
        %v1087 = vld [vmem:[#allocation10 + $0x60] sm:$0xff]
        %v1088 = vld [vmem:[#allocation10 + $0x68] sm:$0xff]
        %v1089 = vld [vmem:[#allocation10 + $0x70] sm:$0xff]
        %v1090 = vld [vmem:[#allocation10 + $0x78] sm:$0xff]
        %v1091 = vld [vmem:[%s4] sm:$0x1]
        %v1093 = vlaneseq
        %v1094 = vshrl.u32 %v1093, 7
        %v1095 = vsub.s32 0, %v1094
        %v1096 = vrot.slane %v1091, %v1095
        %1098 = vmatprep.subr.mxu0 0.0
        %1099 = vmatpush1.msra.mxu0 %v1075
        %1100 = vmatprep.subr.mxu0 0.0
        %1101 = vmatpush1.msra.mxu0 %v1076
        %1102 = vmatprep.subr.mxu0 0.0
        %1103 = vmatpush1.msra.mxu0 %v1077
        %1104 = vmatprep.subr.mxu0 0.0
        %1105 = vmatpush1.msra.mxu0 %v1078
        %1106 = vmatprep.subr.mxu0 0.0
        %1107 = vmatpush1.msra.mxu0 %v1079
        %1108 = vmatprep.subr.mxu0 0.0
        %1109 = vmatpush1.msra.mxu0 %v1080
        %1110 = vmatprep.subr.mxu0 0.0
        %1111 = vmatpush1.msra.mxu0 %v1081
        %1112 = vmatprep.subr.mxu0 0.0
        %1113 = vmatpush1.msra.mxu0 %v1082
        %1114 = vmatprep.subr.mxu0 0.0
        %1115 = vmatpush1.msra.mxu0 %v1083
        %1116 = vmatprep.subr.mxu0 0.0
        %1117 = vmatpush1.msra.mxu0 %v1084
        %1118 = vmatprep.subr.mxu0 0.0
        %1119 = vmatpush1.msra.mxu0 %v1085
        %1120 = vmatprep.subr.mxu0 0.0
        %1121 = vmatpush1.msra.mxu0 %v1086
        %1122 = vmatprep.subr.mxu0 0.0
        %1123 = vmatpush1.msra.mxu0 %v1087
        %1124 = vmatprep.subr.mxu0 0.0
        %1125 = vmatpush1.msra.mxu0 %v1088
        %1126 = vmatprep.subr.mxu0 0.0
        %1127 = vmatpush1.msra.mxu0 %v1089
        %1128 = vmatprep.subr.mxu0 0.0
        %1129 = vmatpush1.msra.mxu0 %v1090
        %1130 = vmatprep.subr.mxu0 0.0
        %1131 = vmatpush1.msra.mxu0 0.0
        %1132 = vmatprep.subr.mxu0 0.0
        %1133 = vmatpush1.msra.mxu0 0.0
        %1134 = vmatprep.subr.mxu0 0.0
        %1135 = vmatpush1.msra.mxu0 0.0
        %1136 = vmatprep.subr.mxu0 0.0
        %1137 = vmatpush1.msra.mxu0 0.0
        %1138 = vmatprep.subr.mxu0 0.0
        %1139 = vmatpush1.msra.mxu0 0.0
        %1140 = vmatprep.subr.mxu0 0.0
        %1141 = vmatpush1.msra.mxu0 0.0
        %1142 = vmatprep.subr.mxu0 0.0
        %1143 = vmatpush1.msra.mxu0 0.0
        %1144 = vmatprep.subr.mxu0 0.0
        %1145 = vmatpush1.msra.mxu0 0.0
        %1146 = vmatprep.subr.mxu0 0.0
        %1147 = vmatpush1.msra.mxu0 0.0
        %1148 = vmatprep.subr.mxu0 0.0
        %1149 = vmatpush1.msra.mxu0 0.0
        %1150 = vmatprep.subr.mxu0 0.0
        %1151 = vmatpush1.msra.mxu0 0.0
        %1152 = vmatprep.subr.mxu0 0.0
        %1153 = vmatpush1.msra.mxu0 0.0
        %1154 = vmatprep.subr.mxu0 0.0
        %1155 = vmatpush1.msra.mxu0 0.0
        %1156 = vmatprep.subr.mxu0 0.0
        %1157 = vmatpush1.msra.mxu0 0.0
        %1158 = vmatprep.subr.mxu0 0.0
        %1159 = vmatpush1.msra.mxu0 0.0
        %1160 = vmatprep.subr.mxu0 0.0
        %1161 = vmatpush1.msra.mxu0 0.0
        %1162 = vmatprep.mubr.f32.mxu0 0.0
        %1163 = vmatmul.mubr.f32.gmra.mrb[0].mxu0 %v1074
        %v1164 = vpop.f32.mrb[0].mxu0
        %v1165 = vadd.f32 %v1096, %v1164
        %v1166 = vpop.f32.mrb[0].mxu0
        %1167 = vdwg.mxu0
        %1168 = vmax.xlane.f32.xlu0 %v1165
        %v1169 = vpop.xlane.xlu0 %1168
        %v1170 = vsub.f32 %v1165, %v1169
        %v1171 = vmul.f32 %v1170, 1.442695
        %v1172 = vpow.pop %v1171
        %1173 = vadd.xlane.f32.xlu0 %v1172
        %v1174 = vpop.xlane.xlu0 %1173
        %v1175 = vlog2.pop %v1174
        %v1176 = vmul.f32 %v1175, 0.6931472
        %v1177 = vadd.f32 %v1169, %v1176
        %v1178 = vsub.f32 %v1165, %v1177
        %s1179 = scalar_lea.vmem %s290, 8 [#allocation11]
        %1180 = vst [vmem:[%s1179] sm:$0xff] %v1178
        %vm1181 = vcmp.eq.f32.partialorder %v1165, %v1169
        %v1182 = vsel %vm1181, %v297, 128
        %v1183 = vand.u32 %v1182, 65535
        %v1184 = vshra.s32 %v1182, 16
        %v1185 = vcvt.s32.f32 %v1183
        %v1186 = vcvt.s32.f32 %v1184
        %1187 = vmin.xlane.f32.xlu0 %v1186
        %v1188 = vpop.xlane.xlu0 %1187
        %vm1189 = vcmp.eq.f32.partialorder %v1186, %v1188
        %v1190 = vsel %vm1189, %v1185, inf
        %1191 = vmin.xlane.f32.xlu0 %v1190
        %v1192 = vpop.xlane.xlu0 %1191
        %v1193 = vcvt.f32.s32 %v1192
        %v1194 = vcvt.f32.s32 %v1188
        %v1195 = vshll.u32 %v1194, 16
        %v1196 = vadd.s32 %v1195, %v1193
        %vm1197 = vcmp.eq.s32.totalorder %v297, %v1196
        %v1198 = vsel %vm1197, 1, 0
        %v1199 = vcvt.s32.f32 %v1198
        %s1200 = sadd.s32 %s309, 1
        %p1201 = scmp.lt.s32.totalorder %s1200, 10
        %s1202 = scalar_select %p1201, 1, 0
        %v1203 = vstv %s1202
        %vm1204 = vcmp.eq.s32.totalorder %v1203, 1
        %v1205 = vsel %vm1204, %v1074, %v757
        %v1206 = vsel %vm1204, %v1072, %v758
        %v1207 = vld [vmem:[#allocation8] sm:$0xff]
        %v1208 = vld [vmem:[#allocation8 + $0x8] sm:$0xff]
        %v1209 = vld [vmem:[#allocation8 + $0x10] sm:$0xff]
        %v1210 = vld [vmem:[#allocation8 + $0x18] sm:$0xff]
        %v1211 = vld [vmem:[#allocation8 + $0x20] sm:$0xff]
        %v1212 = vld [vmem:[#allocation8 + $0x28] sm:$0xff]
        %v1213 = vld [vmem:[#allocation8 + $0x30] sm:$0xff]
        %v1214 = vld [vmem:[#allocation8 + $0x38] sm:$0xff]
        %v1215 = vld [vmem:[#allocation8 + $0x40] sm:$0xff]
        %v1216 = vld [vmem:[#allocation8 + $0x48] sm:$0xff]
        %v1217 = vld [vmem:[#allocation8 + $0x50] sm:$0xff]
        %v1218 = vld [vmem:[#allocation8 + $0x58] sm:$0xff]
        %v1219 = vld [vmem:[#allocation8 + $0x60] sm:$0xff]
        %v1220 = vld [vmem:[#allocation8 + $0x68] sm:$0xff]
        %v1221 = vld [vmem:[#allocation8 + $0x70] sm:$0xff]
        %v1222 = vld [vmem:[#allocation8 + $0x78] sm:$0xff]
        %v1223 = vld [vmem:[#allocation8 + $0x80] sm:$0xff]
        %v1224 = vld [vmem:[#allocation8 + $0x88] sm:$0xff]
        %v1225 = vld [vmem:[#allocation8 + $0x90] sm:$0xff]
        %v1226 = vld [vmem:[#allocation8 + $0x98] sm:$0xff]
        %v1227 = vld [vmem:[#allocation8 + $0xa0] sm:$0xff]
        %v1228 = vld [vmem:[#allocation8 + $0xa8] sm:$0xff]
        %v1229 = vld [vmem:[#allocation8 + $0xb0] sm:$0xff]
        %v1230 = vld [vmem:[#allocation8 + $0xb8] sm:$0xff]
        %v1231 = vld [vmem:[#allocation8 + $0xc0] sm:$0xff]
        %v1232 = vld [vmem:[#allocation8 + $0xc8] sm:$0xff]
        %v1233 = vld [vmem:[#allocation8 + $0xd0] sm:$0xff]
        %v1234 = vld [vmem:[#allocation8 + $0xd8] sm:$0xff]
        %v1235 = vld [vmem:[#allocation8 + $0xe0] sm:$0xff]
        %v1236 = vld [vmem:[#allocation8 + $0xe8] sm:$0xff]
        %v1237 = vld [vmem:[#allocation8 + $0xf0] sm:$0xff]
        %v1238 = vld [vmem:[#allocation8 + $0xf8] sm:$0xff]
        %v1239 = vld [vmem:[#allocation8 + $0x100] sm:$0xff]
        %v1240 = vld [vmem:[#allocation8 + $0x108] sm:$0xff]
        %v1241 = vld [vmem:[#allocation8 + $0x110] sm:$0xff]
        %v1242 = vld [vmem:[#allocation8 + $0x118] sm:$0xff]
        %v1243 = vld [vmem:[#allocation8 + $0x120] sm:$0xff]
        %v1244 = vld [vmem:[#allocation8 + $0x128] sm:$0xff]
        %v1245 = vld [vmem:[#allocation8 + $0x130] sm:$0xff]
        %v1246 = vld [vmem:[#allocation8 + $0x138] sm:$0xff]
        %v1247 = vld [vmem:[#allocation8 + $0x140] sm:$0xff]
        %v1248 = vld [vmem:[#allocation8 + $0x148] sm:$0xff]
        %v1249 = vld [vmem:[#allocation8 + $0x150] sm:$0xff]
        %v1250 = vld [vmem:[#allocation8 + $0x158] sm:$0xff]
        %v1251 = vld [vmem:[#allocation8 + $0x160] sm:$0xff]
        %v1252 = vld [vmem:[#allocation8 + $0x168] sm:$0xff]
        %v1253 = vld [vmem:[#allocation8 + $0x170] sm:$0xff]
        %v1254 = vld [vmem:[#allocation8 + $0x178] sm:$0xff]
        %v1255 = vld [vmem:[#allocation8 + $0x180] sm:$0xff]
        %v1256 = vld [vmem:[#allocation8 + $0x188] sm:$0xff]
        %v1257 = vld [vmem:[#allocation8 + $0x190] sm:$0xff]
        %v1258 = vld [vmem:[#allocation8 + $0x198] sm:$0xff]
        %v1259 = vld [vmem:[#allocation8 + $0x1a0] sm:$0xff]
        %v1260 = vld [vmem:[#allocation8 + $0x1a8] sm:$0xff]
        %v1261 = vld [vmem:[#allocation8 + $0x1b0] sm:$0xff]
        %v1262 = vld [vmem:[#allocation8 + $0x1b8] sm:$0xff]
        %v1263 = vld [vmem:[#allocation8 + $0x1c0] sm:$0xff]
        %v1264 = vld [vmem:[#allocation8 + $0x1c8] sm:$0xff]
        %v1265 = vld [vmem:[#allocation8 + $0x1d0] sm:$0xff]
        %v1266 = vld [vmem:[#allocation8 + $0x1d8] sm:$0xff]
        %v1267 = vld [vmem:[#allocation8 + $0x1e0] sm:$0xff]
        %v1268 = vld [vmem:[#allocation8 + $0x1e8] sm:$0xff]
        %v1269 = vld [vmem:[#allocation8 + $0x1f0] sm:$0xff]
        %v1270 = vld [vmem:[#allocation8 + $0x1f8] sm:$0xff]
        %v1271 = vld [vmem:[#allocation8 + $0x200] sm:$0xff]
        %v1272 = vld [vmem:[#allocation8 + $0x208] sm:$0xff]
        %v1273 = vld [vmem:[#allocation8 + $0x210] sm:$0xff]
        %v1274 = vld [vmem:[#allocation8 + $0x218] sm:$0xff]
        %v1275 = vld [vmem:[#allocation8 + $0x220] sm:$0xff]
        %v1276 = vld [vmem:[#allocation8 + $0x228] sm:$0xff]
        %v1277 = vld [vmem:[#allocation8 + $0x230] sm:$0xff]
        %v1278 = vld [vmem:[#allocation8 + $0x238] sm:$0xff]
        %v1279 = vld [vmem:[#allocation8 + $0x240] sm:$0xff]
        %v1280 = vld [vmem:[#allocation8 + $0x248] sm:$0xff]
        %v1281 = vld [vmem:[#allocation8 + $0x250] sm:$0xff]
        %v1282 = vld [vmem:[#allocation8 + $0x258] sm:$0xff]
        %v1283 = vld [vmem:[#allocation8 + $0x260] sm:$0xff]
        %v1284 = vld [vmem:[#allocation8 + $0x268] sm:$0xff]
        %v1285 = vld [vmem:[#allocation8 + $0x270] sm:$0xff]
        %v1286 = vld [vmem:[#allocation8 + $0x278] sm:$0xff]
        %v1287 = vld [vmem:[#allocation8 + $0x280] sm:$0xff]
        %v1288 = vld [vmem:[#allocation8 + $0x288] sm:$0xff]
        %v1289 = vld [vmem:[#allocation8 + $0x290] sm:$0xff]
        %v1290 = vld [vmem:[#allocation8 + $0x298] sm:$0xff]
        %v1291 = vld [vmem:[#allocation8 + $0x2a0] sm:$0xff]
        %v1292 = vld [vmem:[#allocation8 + $0x2a8] sm:$0xff]
        %v1293 = vld [vmem:[#allocation8 + $0x2b0] sm:$0xff]
        %v1294 = vld [vmem:[#allocation8 + $0x2b8] sm:$0xff]
        %v1295 = vld [vmem:[#allocation8 + $0x2c0] sm:$0xff]
        %v1296 = vld [vmem:[#allocation8 + $0x2c8] sm:$0xff]
        %v1297 = vld [vmem:[#allocation8 + $0x2d0] sm:$0xff]
        %v1298 = vld [vmem:[#allocation8 + $0x2d8] sm:$0xff]
        %v1299 = vld [vmem:[#allocation8 + $0x2e0] sm:$0xff]
        %v1300 = vld [vmem:[#allocation8 + $0x2e8] sm:$0xff]
        %v1301 = vld [vmem:[#allocation8 + $0x2f0] sm:$0xff]
        %v1302 = vld [vmem:[#allocation8 + $0x2f8] sm:$0xff]
        %v1303 = vld [vmem:[#allocation8 + $0x300] sm:$0xff]
        %v1304 = vld [vmem:[#allocation8 + $0x308] sm:$0xff]
        %v1305 = vld [vmem:[#allocation8 + $0x310] sm:$0xff]
        %v1306 = vld [vmem:[#allocation8 + $0x318] sm:$0xff]
        %v1307 = vld [vmem:[#allocation8 + $0x320] sm:$0xff]
        %v1308 = vld [vmem:[#allocation8 + $0x328] sm:$0xff]
        %v1309 = vld [vmem:[#allocation8 + $0x330] sm:$0xff]
        %v1310 = vld [vmem:[#allocation8 + $0x338] sm:$0xff]
        %v1311 = vld [vmem:[#allocation8 + $0x340] sm:$0xff]
        %v1312 = vld [vmem:[#allocation8 + $0x348] sm:$0xff]
        %v1313 = vld [vmem:[#allocation8 + $0x350] sm:$0xff]
        %v1314 = vld [vmem:[#allocation8 + $0x358] sm:$0xff]
        %v1315 = vld [vmem:[#allocation8 + $0x360] sm:$0xff]
        %v1316 = vld [vmem:[#allocation8 + $0x368] sm:$0xff]
        %v1317 = vld [vmem:[#allocation8 + $0x370] sm:$0xff]
        %v1318 = vld [vmem:[#allocation8 + $0x378] sm:$0xff]
        %v1319 = vld [vmem:[#allocation8 + $0x380] sm:$0xff]
        %v1320 = vld [vmem:[#allocation8 + $0x388] sm:$0xff]
        %v1321 = vld [vmem:[#allocation8 + $0x390] sm:$0xff]
        %v1322 = vld [vmem:[#allocation8 + $0x398] sm:$0xff]
        %v1323 = vld [vmem:[#allocation8 + $0x3a0] sm:$0xff]
        %v1324 = vld [vmem:[#allocation8 + $0x3a8] sm:$0xff]
        %v1325 = vld [vmem:[#allocation8 + $0x3b0] sm:$0xff]
        %v1326 = vld [vmem:[#allocation8 + $0x3b8] sm:$0xff]
        %v1327 = vld [vmem:[#allocation8 + $0x3c0] sm:$0xff]
        %v1328 = vld [vmem:[#allocation8 + $0x3c8] sm:$0xff]
        %v1329 = vld [vmem:[#allocation8 + $0x3d0] sm:$0xff]
        %v1330 = vld [vmem:[#allocation8 + $0x3d8] sm:$0xff]
        %v1331 = vld [vmem:[#allocation8 + $0x3e0] sm:$0xff]
        %v1332 = vld [vmem:[#allocation8 + $0x3e8] sm:$0xff]
        %v1333 = vld [vmem:[#allocation8 + $0x3f0] sm:$0xff]
        %v1334 = vld [vmem:[#allocation8 + $0x3f8] sm:$0xff]
        %v1335 = vld [vmem:[%s2] sm:$0xf]
        %v1337 = vlaneseq
        %v1338 = vshrl.u32 %v1337, 7
        %v1339 = vsub.s32 0, %v1338
        %v1340 = vrot.slane %v1335, %v1339
        %v1341 = vlaneseq
        %v1342 = vshrl.u32 %v1341, 7
        %v1343 = vsub.s32 1, %v1342
        %v1344 = vrot.slane %v1335, %v1343
        %v1345 = vlaneseq
        %v1346 = vshrl.u32 %v1345, 7
        %v1347 = vsub.s32 2, %v1346
        %v1348 = vrot.slane %v1335, %v1347
        %v1349 = vlaneseq
        %v1350 = vshrl.u32 %v1349, 7
        %v1351 = vsub.s32 3, %v1350
        %v1352 = vrot.slane %v1335, %v1351
        %1357 = vmatprep.subr.mxu0 %v1208
        %1358 = vmatpush1.msra.mxu0 %v1207
        %1359 = vmatprep.subr.mxu0 %v1212
        %1360 = vmatpush1.msra.mxu0 %v1211
        %1361 = vmatprep.subr.mxu0 %v1216
        %1362 = vmatpush1.msra.mxu0 %v1215
        %1363 = vmatprep.subr.mxu0 %v1220
        %1364 = vmatpush1.msra.mxu0 %v1219
        %1365 = vmatprep.subr.mxu0 %v1224
        %1366 = vmatpush1.msra.mxu0 %v1223
        %1367 = vmatprep.subr.mxu0 %v1228
        %1368 = vmatpush1.msra.mxu0 %v1227
        %1369 = vmatprep.subr.mxu0 %v1232
        %1370 = vmatpush1.msra.mxu0 %v1231
        %1371 = vmatprep.subr.mxu0 %v1236
        %1372 = vmatpush1.msra.mxu0 %v1235
        %1373 = vmatprep.subr.mxu0 %v1240
        %1374 = vmatpush1.msra.mxu0 %v1239
        %1375 = vmatprep.subr.mxu0 %v1244
        %1376 = vmatpush1.msra.mxu0 %v1243
        %1377 = vmatprep.subr.mxu0 %v1248
        %1378 = vmatpush1.msra.mxu0 %v1247
        %1379 = vmatprep.subr.mxu0 %v1252
        %1380 = vmatpush1.msra.mxu0 %v1251
        %1381 = vmatprep.subr.mxu0 %v1256
        %1382 = vmatpush1.msra.mxu0 %v1255
        %1383 = vmatprep.subr.mxu0 %v1260
        %1384 = vmatpush1.msra.mxu0 %v1259
        %1385 = vmatprep.subr.mxu0 %v1264
        %1386 = vmatpush1.msra.mxu0 %v1263
        %1387 = vmatprep.subr.mxu0 %v1268
        %1388 = vmatpush1.msra.mxu0 %v1267
        %1389 = vmatprep.subr.mxu0 %v1272
        %1390 = vmatpush1.msra.mxu0 %v1271
        %1391 = vmatprep.subr.mxu0 %v1276
        %1392 = vmatpush1.msra.mxu0 %v1275
        %1393 = vmatprep.subr.mxu0 %v1280
        %1394 = vmatpush1.msra.mxu0 %v1279
        %1395 = vmatprep.subr.mxu0 %v1284
        %1396 = vmatpush1.msra.mxu0 %v1283
        %1397 = vmatprep.subr.mxu0 %v1288
        %1398 = vmatpush1.msra.mxu0 %v1287
        %1399 = vmatprep.subr.mxu0 %v1292
        %1400 = vmatpush1.msra.mxu0 %v1291
        %1401 = vmatprep.subr.mxu0 %v1296
        %1402 = vmatpush1.msra.mxu0 %v1295
        %1403 = vmatprep.subr.mxu0 %v1300
        %1404 = vmatpush1.msra.mxu0 %v1299
        %1405 = vmatprep.subr.mxu0 %v1304
        %1406 = vmatpush1.msra.mxu0 %v1303
        %1407 = vmatprep.subr.mxu0 %v1308
        %1408 = vmatpush1.msra.mxu0 %v1307
        %1409 = vmatprep.subr.mxu0 %v1312
        %1410 = vmatpush1.msra.mxu0 %v1311
        %1411 = vmatprep.subr.mxu0 %v1316
        %1412 = vmatpush1.msra.mxu0 %v1315
        %1413 = vmatprep.subr.mxu0 %v1320
        %1414 = vmatpush1.msra.mxu0 %v1319
        %1415 = vmatprep.subr.mxu0 %v1324
        %1416 = vmatpush1.msra.mxu0 %v1323
        %1417 = vmatprep.subr.mxu0 %v1328
        %1418 = vmatpush1.msra.mxu0 %v1327
        %1419 = vmatprep.subr.mxu0 %v1332
        %1420 = vmatpush1.msra.mxu0 %v1331
        %1421 = vmatprep.mubr.f32.mxu0 %v1205
        %1422 = vmatmul.mubr.f32.gmra.mrb[0].mxu0 %v1199
        %v1423 = vpop.f32.mrb[0].mxu0
        %v1424 = vadd.f32 %v1340, %v1423
        %v1425 = vpop.f32.mrb[0].mxu0
        %v1426 = vadd.f32 %v1344, %v1425
        %1427 = vdwg.mxu0
        %1428 = vmatprep.subr.mxu0 %v1210
        %1429 = vmatpush1.msra.mxu0 %v1209
        %1430 = vmatprep.subr.mxu0 %v1214
        %1431 = vmatpush1.msra.mxu0 %v1213
        %1432 = vmatprep.subr.mxu0 %v1218
        %1433 = vmatpush1.msra.mxu0 %v1217
        %1434 = vmatprep.subr.mxu0 %v1222
        %1435 = vmatpush1.msra.mxu0 %v1221
        %1436 = vmatprep.subr.mxu0 %v1226
        %1437 = vmatpush1.msra.mxu0 %v1225
        %1438 = vmatprep.subr.mxu0 %v1230
        %1439 = vmatpush1.msra.mxu0 %v1229
        %1440 = vmatprep.subr.mxu0 %v1234
        %1441 = vmatpush1.msra.mxu0 %v1233
        %1442 = vmatprep.subr.mxu0 %v1238
        %1443 = vmatpush1.msra.mxu0 %v1237
        %1444 = vmatprep.subr.mxu0 %v1242
        %1445 = vmatpush1.msra.mxu0 %v1241
        %1446 = vmatprep.subr.mxu0 %v1246
        %1447 = vmatpush1.msra.mxu0 %v1245
        %1448 = vmatprep.subr.mxu0 %v1250
        %1449 = vmatpush1.msra.mxu0 %v1249
        %1450 = vmatprep.subr.mxu0 %v1254
        %1451 = vmatpush1.msra.mxu0 %v1253
        %1452 = vmatprep.subr.mxu0 %v1258
        %1453 = vmatpush1.msra.mxu0 %v1257
        %1454 = vmatprep.subr.mxu0 %v1262
        %1455 = vmatpush1.msra.mxu0 %v1261
        %1456 = vmatprep.subr.mxu0 %v1266
        %1457 = vmatpush1.msra.mxu0 %v1265
        %1458 = vmatprep.subr.mxu0 %v1270
        %1459 = vmatpush1.msra.mxu0 %v1269
        %1460 = vmatprep.subr.mxu0 %v1274
        %1461 = vmatpush1.msra.mxu0 %v1273
        %1462 = vmatprep.subr.mxu0 %v1278
        %1463 = vmatpush1.msra.mxu0 %v1277
        %1464 = vmatprep.subr.mxu0 %v1282
        %1465 = vmatpush1.msra.mxu0 %v1281
        %1466 = vmatprep.subr.mxu0 %v1286
        %1467 = vmatpush1.msra.mxu0 %v1285
        %1468 = vmatprep.subr.mxu0 %v1290
        %1469 = vmatpush1.msra.mxu0 %v1289
        %1470 = vmatprep.subr.mxu0 %v1294
        %1471 = vmatpush1.msra.mxu0 %v1293
        %1472 = vmatprep.subr.mxu0 %v1298
        %1473 = vmatpush1.msra.mxu0 %v1297
        %1474 = vmatprep.subr.mxu0 %v1302
        %1475 = vmatpush1.msra.mxu0 %v1301
        %1476 = vmatprep.subr.mxu0 %v1306
        %1477 = vmatpush1.msra.mxu0 %v1305
        %1478 = vmatprep.subr.mxu0 %v1310
        %1479 = vmatpush1.msra.mxu0 %v1309
        %1480 = vmatprep.subr.mxu0 %v1314
        %1481 = vmatpush1.msra.mxu0 %v1313
        %1482 = vmatprep.subr.mxu0 %v1318
        %1483 = vmatpush1.msra.mxu0 %v1317
        %1484 = vmatprep.subr.mxu0 %v1322
        %1485 = vmatpush1.msra.mxu0 %v1321
        %1486 = vmatprep.subr.mxu0 %v1326
        %1487 = vmatpush1.msra.mxu0 %v1325
        %1488 = vmatprep.subr.mxu0 %v1330
        %1489 = vmatpush1.msra.mxu0 %v1329
        %1490 = vmatprep.subr.mxu0 %v1334
        %1491 = vmatpush1.msra.mxu0 %v1333
        %1492 = vmatprep.mubr.f32.mxu0 %v1205
        %1493 = vmatmul.mubr.f32.gmra.mrb[0].mxu0 %v1199
        %v1494 = vpop.f32.mrb[0].mxu0
        %v1495 = vadd.f32 %v1348, %v1494
        %v1496 = vpop.f32.mrb[0].mxu0
        %v1497 = vadd.f32 %v1352, %v1496
        %1498 = vdwg.mxu0
        %v1499 = vxor.u32 %v1424, 2147483648
        %v1500 = vmul.f32 %v1499, 1.442695
        %v1501 = vpow.pop %v1500
        %v1502 = vadd.f32 %v1501, 1.0
        %v1503 = vrcp.pop %v1502
        %v1504 = vmul.f32 1.0, %v1503
        %v1505 = vxor.u32 %v1426, 2147483648
        %v1506 = vmul.f32 %v1505, 1.442695
        %v1507 = vpow.pop %v1506
        %v1508 = vadd.f32 %v1507, 1.0
        %v1509 = vrcp.pop %v1508
        %v1510 = vmul.f32 1.0, %v1509
        %v1511 = vtanh.pop %v1495
        %v1512 = vxor.u32 %v1497, 2147483648
        %v1513 = vmul.f32 %v1512, 1.442695
        %v1514 = vpow.pop %v1513
        %v1515 = vadd.f32 %v1514, 1.0
        %v1516 = vrcp.pop %v1515
        %v1517 = vmul.f32 1.0, %v1516
        %v1518 = vmul.f32 %v1510, %v1206
        %v1519 = vmul.f32 %v1504, %v1511
        %v1520 = vadd.f32 %v1518, %v1519
        %v1521 = vtanh.pop %v1520
        %v1522 = vmul.f32 %v1517, %v1521
        %v1523 = vld [vmem:[#allocation10] sm:$0xff]
        %v1524 = vld [vmem:[#allocation10 + $0x8] sm:$0xff]
        %v1525 = vld [vmem:[#allocation10 + $0x10] sm:$0xff]
        %v1526 = vld [vmem:[#allocation10 + $0x18] sm:$0xff]
        %v1527 = vld [vmem:[#allocation10 + $0x20] sm:$0xff]
        %v1528 = vld [vmem:[#allocation10 + $0x28] sm:$0xff]
        %v1529 = vld [vmem:[#allocation10 + $0x30] sm:$0xff]
        %v1530 = vld [vmem:[#allocation10 + $0x38] sm:$0xff]
        %v1531 = vld [vmem:[#allocation10 + $0x40] sm:$0xff]
        %v1532 = vld [vmem:[#allocation10 + $0x48] sm:$0xff]
        %v1533 = vld [vmem:[#allocation10 + $0x50] sm:$0xff]
        %v1534 = vld [vmem:[#allocation10 + $0x58] sm:$0xff]
        %v1535 = vld [vmem:[#allocation10 + $0x60] sm:$0xff]
        %v1536 = vld [vmem:[#allocation10 + $0x68] sm:$0xff]
        %v1537 = vld [vmem:[#allocation10 + $0x70] sm:$0xff]
        %v1538 = vld [vmem:[#allocation10 + $0x78] sm:$0xff]
        %v1539 = vld [vmem:[%s4] sm:$0x1]
        %v1541 = vlaneseq
        %v1542 = vshrl.u32 %v1541, 7
        %v1543 = vsub.s32 0, %v1542
        %v1544 = vrot.slane %v1539, %v1543
        %1546 = vmatprep.subr.mxu0 0.0
        %1547 = vmatpush1.msra.mxu0 %v1523
        %1548 = vmatprep.subr.mxu0 0.0
        %1549 = vmatpush1.msra.mxu0 %v1524
        %1550 = vmatprep.subr.mxu0 0.0
        %1551 = vmatpush1.msra.mxu0 %v1525
        %1552 = vmatprep.subr.mxu0 0.0
        %1553 = vmatpush1.msra.mxu0 %v1526
        %1554 = vmatprep.subr.mxu0 0.0
        %1555 = vmatpush1.msra.mxu0 %v1527
        %1556 = vmatprep.subr.mxu0 0.0
        %1557 = vmatpush1.msra.mxu0 %v1528
        %1558 = vmatprep.subr.mxu0 0.0
        %1559 = vmatpush1.msra.mxu0 %v1529
        %1560 = vmatprep.subr.mxu0 0.0
        %1561 = vmatpush1.msra.mxu0 %v1530
        %1562 = vmatprep.subr.mxu0 0.0
        %1563 = vmatpush1.msra.mxu0 %v1531
        %1564 = vmatprep.subr.mxu0 0.0
        %1565 = vmatpush1.msra.mxu0 %v1532
        %1566 = vmatprep.subr.mxu0 0.0
        %1567 = vmatpush1.msra.mxu0 %v1533
        %1568 = vmatprep.subr.mxu0 0.0
        %1569 = vmatpush1.msra.mxu0 %v1534
        %1570 = vmatprep.subr.mxu0 0.0
        %1571 = vmatpush1.msra.mxu0 %v1535
        %1572 = vmatprep.subr.mxu0 0.0
        %1573 = vmatpush1.msra.mxu0 %v1536
        %1574 = vmatprep.subr.mxu0 0.0
        %1575 = vmatpush1.msra.mxu0 %v1537
        %1576 = vmatprep.subr.mxu0 0.0
        %1577 = vmatpush1.msra.mxu0 %v1538
        %1578 = vmatprep.subr.mxu0 0.0
        %1579 = vmatpush1.msra.mxu0 0.0
        %1580 = vmatprep.subr.mxu0 0.0
        %1581 = vmatpush1.msra.mxu0 0.0
        %1582 = vmatprep.subr.mxu0 0.0
        %1583 = vmatpush1.msra.mxu0 0.0
        %1584 = vmatprep.subr.mxu0 0.0
        %1585 = vmatpush1.msra.mxu0 0.0
        %1586 = vmatprep.subr.mxu0 0.0
        %1587 = vmatpush1.msra.mxu0 0.0
        %1588 = vmatprep.subr.mxu0 0.0
        %1589 = vmatpush1.msra.mxu0 0.0
        %1590 = vmatprep.subr.mxu0 0.0
        %1591 = vmatpush1.msra.mxu0 0.0
        %1592 = vmatprep.subr.mxu0 0.0
        %1593 = vmatpush1.msra.mxu0 0.0
        %1594 = vmatprep.subr.mxu0 0.0
        %1595 = vmatpush1.msra.mxu0 0.0
        %1596 = vmatprep.subr.mxu0 0.0
        %1597 = vmatpush1.msra.mxu0 0.0
        %1598 = vmatprep.subr.mxu0 0.0
        %1599 = vmatpush1.msra.mxu0 0.0
        %1600 = vmatprep.subr.mxu0 0.0
        %1601 = vmatpush1.msra.mxu0 0.0
        %1602 = vmatprep.subr.mxu0 0.0
        %1603 = vmatpush1.msra.mxu0 0.0
        %1604 = vmatprep.subr.mxu0 0.0
        %1605 = vmatpush1.msra.mxu0 0.0
        %1606 = vmatprep.subr.mxu0 0.0
        %1607 = vmatpush1.msra.mxu0 0.0
        %1608 = vmatprep.subr.mxu0 0.0
        %1609 = vmatpush1.msra.mxu0 0.0
        %1610 = vmatprep.mubr.f32.mxu0 0.0
        %1611 = vmatmul.mubr.f32.gmra.mrb[0].mxu0 %v1522
        %v1612 = vpop.f32.mrb[0].mxu0
        %v1613 = vadd.f32 %v1544, %v1612
        %v1614 = vpop.f32.mrb[0].mxu0
        %1615 = vdwg.mxu0
        %1616 = vmax.xlane.f32.xlu0 %v1613
        %v1617 = vpop.xlane.xlu0 %1616
        %v1618 = vsub.f32 %v1613, %v1617
        %v1619 = vmul.f32 %v1618, 1.442695
        %v1620 = vpow.pop %v1619
        %1621 = vadd.xlane.f32.xlu0 %v1620
        %v1622 = vpop.xlane.xlu0 %1621
        %v1623 = vlog2.pop %v1622
        %v1624 = vmul.f32 %v1623, 0.6931472
        %v1625 = vadd.f32 %v1617, %v1624
        %v1626 = vsub.f32 %v1613, %v1625
        %s1627 = scalar_lea.vmem %s290, 16 [#allocation11]
        %1628 = vst [vmem:[%s1627] sm:$0xff] %v1626
        %vm1629 = vcmp.eq.f32.partialorder %v1613, %v1617
        %v1630 = vsel %vm1629, %v297, 128
        %v1631 = vand.u32 %v1630, 65535
        %v1632 = vshra.s32 %v1630, 16
        %v1633 = vcvt.s32.f32 %v1631
        %v1634 = vcvt.s32.f32 %v1632
        %1635 = vmin.xlane.f32.xlu0 %v1634
        %v1636 = vpop.xlane.xlu0 %1635
        %vm1637 = vcmp.eq.f32.partialorder %v1634, %v1636
        %v1638 = vsel %vm1637, %v1633, inf
        %1639 = vmin.xlane.f32.xlu0 %v1638
        %v1640 = vpop.xlane.xlu0 %1639
        %v1641 = vcvt.f32.s32 %v1640
        %v1642 = vcvt.f32.s32 %v1636
        %v1643 = vshll.u32 %v1642, 16
        %v1644 = vadd.s32 %v1643, %v1641
        %vm1645 = vcmp.eq.s32.totalorder %v297, %v1644
        %v1646 = vsel %vm1645, 1, 0
        %v1647 = vcvt.s32.f32 %v1646
        %s1648 = sadd.s32 %s309, 2
        %p1649 = scmp.lt.s32.totalorder %s1648, 10
        %s1650 = scalar_select %p1649, 1, 0
        %v1651 = vstv %s1650
        %vm1652 = vcmp.eq.s32.totalorder %v1651, 1
        %v1653 = vsel %vm1652, %v1522, %v1205
        %v1654 = vsel %vm1652, %v1520, %v1206
        %v1655 = vld [vmem:[#allocation8] sm:$0xff]
        %v1656 = vld [vmem:[#allocation8 + $0x8] sm:$0xff]
        %v1657 = vld [vmem:[#allocation8 + $0x10] sm:$0xff]
        %v1658 = vld [vmem:[#allocation8 + $0x18] sm:$0xff]
        %v1659 = vld [vmem:[#allocation8 + $0x20] sm:$0xff]
        %v1660 = vld [vmem:[#allocation8 + $0x28] sm:$0xff]
        %v1661 = vld [vmem:[#allocation8 + $0x30] sm:$0xff]
        %v1662 = vld [vmem:[#allocation8 + $0x38] sm:$0xff]
        %v1663 = vld [vmem:[#allocation8 + $0x40] sm:$0xff]
        %v1664 = vld [vmem:[#allocation8 + $0x48] sm:$0xff]
        %v1665 = vld [vmem:[#allocation8 + $0x50] sm:$0xff]
        %v1666 = vld [vmem:[#allocation8 + $0x58] sm:$0xff]
        %v1667 = vld [vmem:[#allocation8 + $0x60] sm:$0xff]
        %v1668 = vld [vmem:[#allocation8 + $0x68] sm:$0xff]
        %v1669 = vld [vmem:[#allocation8 + $0x70] sm:$0xff]
        %v1670 = vld [vmem:[#allocation8 + $0x78] sm:$0xff]
        %v1671 = vld [vmem:[#allocation8 + $0x80] sm:$0xff]
        %v1672 = vld [vmem:[#allocation8 + $0x88] sm:$0xff]
        %v1673 = vld [vmem:[#allocation8 + $0x90] sm:$0xff]
        %v1674 = vld [vmem:[#allocation8 + $0x98] sm:$0xff]
        %v1675 = vld [vmem:[#allocation8 + $0xa0] sm:$0xff]
        %v1676 = vld [vmem:[#allocation8 + $0xa8] sm:$0xff]
        %v1677 = vld [vmem:[#allocation8 + $0xb0] sm:$0xff]
        %v1678 = vld [vmem:[#allocation8 + $0xb8] sm:$0xff]
        %v1679 = vld [vmem:[#allocation8 + $0xc0] sm:$0xff]
        %v1680 = vld [vmem:[#allocation8 + $0xc8] sm:$0xff]
        %v1681 = vld [vmem:[#allocation8 + $0xd0] sm:$0xff]
        %v1682 = vld [vmem:[#allocation8 + $0xd8] sm:$0xff]
        %v1683 = vld [vmem:[#allocation8 + $0xe0] sm:$0xff]
        %v1684 = vld [vmem:[#allocation8 + $0xe8] sm:$0xff]
        %v1685 = vld [vmem:[#allocation8 + $0xf0] sm:$0xff]
        %v1686 = vld [vmem:[#allocation8 + $0xf8] sm:$0xff]
        %v1687 = vld [vmem:[#allocation8 + $0x100] sm:$0xff]
        %v1688 = vld [vmem:[#allocation8 + $0x108] sm:$0xff]
        %v1689 = vld [vmem:[#allocation8 + $0x110] sm:$0xff]
        %v1690 = vld [vmem:[#allocation8 + $0x118] sm:$0xff]
        %v1691 = vld [vmem:[#allocation8 + $0x120] sm:$0xff]
        %v1692 = vld [vmem:[#allocation8 + $0x128] sm:$0xff]
        %v1693 = vld [vmem:[#allocation8 + $0x130] sm:$0xff]
        %v1694 = vld [vmem:[#allocation8 + $0x138] sm:$0xff]
        %v1695 = vld [vmem:[#allocation8 + $0x140] sm:$0xff]
        %v1696 = vld [vmem:[#allocation8 + $0x148] sm:$0xff]
        %v1697 = vld [vmem:[#allocation8 + $0x150] sm:$0xff]
        %v1698 = vld [vmem:[#allocation8 + $0x158] sm:$0xff]
        %v1699 = vld [vmem:[#allocation8 + $0x160] sm:$0xff]
        %v1700 = vld [vmem:[#allocation8 + $0x168] sm:$0xff]
        %v1701 = vld [vmem:[#allocation8 + $0x170] sm:$0xff]
        %v1702 = vld [vmem:[#allocation8 + $0x178] sm:$0xff]
        %v1703 = vld [vmem:[#allocation8 + $0x180] sm:$0xff]
        %v1704 = vld [vmem:[#allocation8 + $0x188] sm:$0xff]
        %v1705 = vld [vmem:[#allocation8 + $0x190] sm:$0xff]
        %v1706 = vld [vmem:[#allocation8 + $0x198] sm:$0xff]
        %v1707 = vld [vmem:[#allocation8 + $0x1a0] sm:$0xff]
        %v1708 = vld [vmem:[#allocation8 + $0x1a8] sm:$0xff]
        %v1709 = vld [vmem:[#allocation8 + $0x1b0] sm:$0xff]
        %v1710 = vld [vmem:[#allocation8 + $0x1b8] sm:$0xff]
        %v1711 = vld [vmem:[#allocation8 + $0x1c0] sm:$0xff]
        %v1712 = vld [vmem:[#allocation8 + $0x1c8] sm:$0xff]
        %v1713 = vld [vmem:[#allocation8 + $0x1d0] sm:$0xff]
        %v1714 = vld [vmem:[#allocation8 + $0x1d8] sm:$0xff]
        %v1715 = vld [vmem:[#allocation8 + $0x1e0] sm:$0xff]
        %v1716 = vld [vmem:[#allocation8 + $0x1e8] sm:$0xff]
        %v1717 = vld [vmem:[#allocation8 + $0x1f0] sm:$0xff]
        %v1718 = vld [vmem:[#allocation8 + $0x1f8] sm:$0xff]
        %v1719 = vld [vmem:[#allocation8 + $0x200] sm:$0xff]
        %v1720 = vld [vmem:[#allocation8 + $0x208] sm:$0xff]
        %v1721 = vld [vmem:[#allocation8 + $0x210] sm:$0xff]
        %v1722 = vld [vmem:[#allocation8 + $0x218] sm:$0xff]
        %v1723 = vld [vmem:[#allocation8 + $0x220] sm:$0xff]
        %v1724 = vld [vmem:[#allocation8 + $0x228] sm:$0xff]
        %v1725 = vld [vmem:[#allocation8 + $0x230] sm:$0xff]
        %v1726 = vld [vmem:[#allocation8 + $0x238] sm:$0xff]
        %v1727 = vld [vmem:[#allocation8 + $0x240] sm:$0xff]
        %v1728 = vld [vmem:[#allocation8 + $0x248] sm:$0xff]
        %v1729 = vld [vmem:[#allocation8 + $0x250] sm:$0xff]
        %v1730 = vld [vmem:[#allocation8 + $0x258] sm:$0xff]
        %v1731 = vld [vmem:[#allocation8 + $0x260] sm:$0xff]
        %v1732 = vld [vmem:[#allocation8 + $0x268] sm:$0xff]
        %v1733 = vld [vmem:[#allocation8 + $0x270] sm:$0xff]
        %v1734 = vld [vmem:[#allocation8 + $0x278] sm:$0xff]
        %v1735 = vld [vmem:[#allocation8 + $0x280] sm:$0xff]
        %v1736 = vld [vmem:[#allocation8 + $0x288] sm:$0xff]
        %v1737 = vld [vmem:[#allocation8 + $0x290] sm:$0xff]
        %v1738 = vld [vmem:[#allocation8 + $0x298] sm:$0xff]
        %v1739 = vld [vmem:[#allocation8 + $0x2a0] sm:$0xff]
        %v1740 = vld [vmem:[#allocation8 + $0x2a8] sm:$0xff]
        %v1741 = vld [vmem:[#allocation8 + $0x2b0] sm:$0xff]
        %v1742 = vld [vmem:[#allocation8 + $0x2b8] sm:$0xff]
        %v1743 = vld [vmem:[#allocation8 + $0x2c0] sm:$0xff]
        %v1744 = vld [vmem:[#allocation8 + $0x2c8] sm:$0xff]
        %v1745 = vld [vmem:[#allocation8 + $0x2d0] sm:$0xff]
        %v1746 = vld [vmem:[#allocation8 + $0x2d8] sm:$0xff]
        %v1747 = vld [vmem:[#allocation8 + $0x2e0] sm:$0xff]
        %v1748 = vld [vmem:[#allocation8 + $0x2e8] sm:$0xff]
        %v1749 = vld [vmem:[#allocation8 + $0x2f0] sm:$0xff]
        %v1750 = vld [vmem:[#allocation8 + $0x2f8] sm:$0xff]
        %v1751 = vld [vmem:[#allocation8 + $0x300] sm:$0xff]
        %v1752 = vld [vmem:[#allocation8 + $0x308] sm:$0xff]
        %v1753 = vld [vmem:[#allocation8 + $0x310] sm:$0xff]
        %v1754 = vld [vmem:[#allocation8 + $0x318] sm:$0xff]
        %v1755 = vld [vmem:[#allocation8 + $0x320] sm:$0xff]
        %v1756 = vld [vmem:[#allocation8 + $0x328] sm:$0xff]
        %v1757 = vld [vmem:[#allocation8 + $0x330] sm:$0xff]
        %v1758 = vld [vmem:[#allocation8 + $0x338] sm:$0xff]
        %v1759 = vld [vmem:[#allocation8 + $0x340] sm:$0xff]
        %v1760 = vld [vmem:[#allocation8 + $0x348] sm:$0xff]
        %v1761 = vld [vmem:[#allocation8 + $0x350] sm:$0xff]
        %v1762 = vld [vmem:[#allocation8 + $0x358] sm:$0xff]
        %v1763 = vld [vmem:[#allocation8 + $0x360] sm:$0xff]
        %v1764 = vld [vmem:[#allocation8 + $0x368] sm:$0xff]
        %v1765 = vld [vmem:[#allocation8 + $0x370] sm:$0xff]
        %v1766 = vld [vmem:[#allocation8 + $0x378] sm:$0xff]
        %v1767 = vld [vmem:[#allocation8 + $0x380] sm:$0xff]
        %v1768 = vld [vmem:[#allocation8 + $0x388] sm:$0xff]
        %v1769 = vld [vmem:[#allocation8 + $0x390] sm:$0xff]
        %v1770 = vld [vmem:[#allocation8 + $0x398] sm:$0xff]
        %v1771 = vld [vmem:[#allocation8 + $0x3a0] sm:$0xff]
        %v1772 = vld [vmem:[#allocation8 + $0x3a8] sm:$0xff]
        %v1773 = vld [vmem:[#allocation8 + $0x3b0] sm:$0xff]
        %v1774 = vld [vmem:[#allocation8 + $0x3b8] sm:$0xff]
        %v1775 = vld [vmem:[#allocation8 + $0x3c0] sm:$0xff]
        %v1776 = vld [vmem:[#allocation8 + $0x3c8] sm:$0xff]
        %v1777 = vld [vmem:[#allocation8 + $0x3d0] sm:$0xff]
        %v1778 = vld [vmem:[#allocation8 + $0x3d8] sm:$0xff]
        %v1779 = vld [vmem:[#allocation8 + $0x3e0] sm:$0xff]
        %v1780 = vld [vmem:[#allocation8 + $0x3e8] sm:$0xff]
        %v1781 = vld [vmem:[#allocation8 + $0x3f0] sm:$0xff]
        %v1782 = vld [vmem:[#allocation8 + $0x3f8] sm:$0xff]
        %v1783 = vld [vmem:[%s2] sm:$0xf]
        %v1785 = vlaneseq
        %v1786 = vshrl.u32 %v1785, 7
        %v1787 = vsub.s32 0, %v1786
        %v1788 = vrot.slane %v1783, %v1787
        %v1789 = vlaneseq
        %v1790 = vshrl.u32 %v1789, 7
        %v1791 = vsub.s32 1, %v1790
        %v1792 = vrot.slane %v1783, %v1791
        %v1793 = vlaneseq
        %v1794 = vshrl.u32 %v1793, 7
        %v1795 = vsub.s32 2, %v1794
        %v1796 = vrot.slane %v1783, %v1795
        %v1797 = vlaneseq
        %v1798 = vshrl.u32 %v1797, 7
        %v1799 = vsub.s32 3, %v1798
        %v1800 = vrot.slane %v1783, %v1799
        %1805 = vmatprep.subr.mxu0 %v1656
        %1806 = vmatpush1.msra.mxu0 %v1655
        %1807 = vmatprep.subr.mxu0 %v1660
        %1808 = vmatpush1.msra.mxu0 %v1659
        %1809 = vmatprep.subr.mxu0 %v1664
        %1810 = vmatpush1.msra.mxu0 %v1663
        %1811 = vmatprep.subr.mxu0 %v1668
        %1812 = vmatpush1.msra.mxu0 %v1667
        %1813 = vmatprep.subr.mxu0 %v1672
        %1814 = vmatpush1.msra.mxu0 %v1671
        %1815 = vmatprep.subr.mxu0 %v1676
        %1816 = vmatpush1.msra.mxu0 %v1675
        %1817 = vmatprep.subr.mxu0 %v1680
        %1818 = vmatpush1.msra.mxu0 %v1679
        %1819 = vmatprep.subr.mxu0 %v1684
        %1820 = vmatpush1.msra.mxu0 %v1683
        %1821 = vmatprep.subr.mxu0 %v1688
        %1822 = vmatpush1.msra.mxu0 %v1687
        %1823 = vmatprep.subr.mxu0 %v1692
        %1824 = vmatpush1.msra.mxu0 %v1691
        %1825 = vmatprep.subr.mxu0 %v1696
        %1826 = vmatpush1.msra.mxu0 %v1695
        %1827 = vmatprep.subr.mxu0 %v1700
        %1828 = vmatpush1.msra.mxu0 %v1699
        %1829 = vmatprep.subr.mxu0 %v1704
        %1830 = vmatpush1.msra.mxu0 %v1703
        %1831 = vmatprep.subr.mxu0 %v1708
        %1832 = vmatpush1.msra.mxu0 %v1707
        %1833 = vmatprep.subr.mxu0 %v1712
        %1834 = vmatpush1.msra.mxu0 %v1711
        %1835 = vmatprep.subr.mxu0 %v1716
        %1836 = vmatpush1.msra.mxu0 %v1715
        %1837 = vmatprep.subr.mxu0 %v1720
        %1838 = vmatpush1.msra.mxu0 %v1719
        %1839 = vmatprep.subr.mxu0 %v1724
        %1840 = vmatpush1.msra.mxu0 %v1723
        %1841 = vmatprep.subr.mxu0 %v1728
        %1842 = vmatpush1.msra.mxu0 %v1727
        %1843 = vmatprep.subr.mxu0 %v1732
        %1844 = vmatpush1.msra.mxu0 %v1731
        %1845 = vmatprep.subr.mxu0 %v1736
        %1846 = vmatpush1.msra.mxu0 %v1735
        %1847 = vmatprep.subr.mxu0 %v1740
        %1848 = vmatpush1.msra.mxu0 %v1739
        %1849 = vmatprep.subr.mxu0 %v1744
        %1850 = vmatpush1.msra.mxu0 %v1743
        %1851 = vmatprep.subr.mxu0 %v1748
        %1852 = vmatpush1.msra.mxu0 %v1747
        %1853 = vmatprep.subr.mxu0 %v1752
        %1854 = vmatpush1.msra.mxu0 %v1751
        %1855 = vmatprep.subr.mxu0 %v1756
        %1856 = vmatpush1.msra.mxu0 %v1755
        %1857 = vmatprep.subr.mxu0 %v1760
        %1858 = vmatpush1.msra.mxu0 %v1759
        %1859 = vmatprep.subr.mxu0 %v1764
        %1860 = vmatpush1.msra.mxu0 %v1763
        %1861 = vmatprep.subr.mxu0 %v1768
        %1862 = vmatpush1.msra.mxu0 %v1767
        %1863 = vmatprep.subr.mxu0 %v1772
        %1864 = vmatpush1.msra.mxu0 %v1771
        %1865 = vmatprep.subr.mxu0 %v1776
        %1866 = vmatpush1.msra.mxu0 %v1775
        %1867 = vmatprep.subr.mxu0 %v1780
        %1868 = vmatpush1.msra.mxu0 %v1779
        %1869 = vmatprep.mubr.f32.mxu0 %v1653
        %1870 = vmatmul.mubr.f32.gmra.mrb[0].mxu0 %v1647
        %v1871 = vpop.f32.mrb[0].mxu0
        %v1872 = vadd.f32 %v1788, %v1871
        %v1873 = vpop.f32.mrb[0].mxu0
        %v1874 = vadd.f32 %v1792, %v1873
        %1875 = vdwg.mxu0
        %1876 = vmatprep.subr.mxu0 %v1658
        %1877 = vmatpush1.msra.mxu0 %v1657
        %1878 = vmatprep.subr.mxu0 %v1662
        %1879 = vmatpush1.msra.mxu0 %v1661
        %1880 = vmatprep.subr.mxu0 %v1666
        %1881 = vmatpush1.msra.mxu0 %v1665
        %1882 = vmatprep.subr.mxu0 %v1670
        %1883 = vmatpush1.msra.mxu0 %v1669
        %1884 = vmatprep.subr.mxu0 %v1674
        %1885 = vmatpush1.msra.mxu0 %v1673
        %1886 = vmatprep.subr.mxu0 %v1678
        %1887 = vmatpush1.msra.mxu0 %v1677
        %1888 = vmatprep.subr.mxu0 %v1682
        %1889 = vmatpush1.msra.mxu0 %v1681
        %1890 = vmatprep.subr.mxu0 %v1686
        %1891 = vmatpush1.msra.mxu0 %v1685
        %1892 = vmatprep.subr.mxu0 %v1690
        %1893 = vmatpush1.msra.mxu0 %v1689
        %1894 = vmatprep.subr.mxu0 %v1694
        %1895 = vmatpush1.msra.mxu0 %v1693
        %1896 = vmatprep.subr.mxu0 %v1698
        %1897 = vmatpush1.msra.mxu0 %v1697
        %1898 = vmatprep.subr.mxu0 %v1702
        %1899 = vmatpush1.msra.mxu0 %v1701
        %1900 = vmatprep.subr.mxu0 %v1706
        %1901 = vmatpush1.msra.mxu0 %v1705
        %1902 = vmatprep.subr.mxu0 %v1710
        %1903 = vmatpush1.msra.mxu0 %v1709
        %1904 = vmatprep.subr.mxu0 %v1714
        %1905 = vmatpush1.msra.mxu0 %v1713
        %1906 = vmatprep.subr.mxu0 %v1718
        %1907 = vmatpush1.msra.mxu0 %v1717
        %1908 = vmatprep.subr.mxu0 %v1722
        %1909 = vmatpush1.msra.mxu0 %v1721
        %1910 = vmatprep.subr.mxu0 %v1726
        %1911 = vmatpush1.msra.mxu0 %v1725
        %1912 = vmatprep.subr.mxu0 %v1730
        %1913 = vmatpush1.msra.mxu0 %v1729
        %1914 = vmatprep.subr.mxu0 %v1734
        %1915 = vmatpush1.msra.mxu0 %v1733
        %1916 = vmatprep.subr.mxu0 %v1738
        %1917 = vmatpush1.msra.mxu0 %v1737
        %1918 = vmatprep.subr.mxu0 %v1742
        %1919 = vmatpush1.msra.mxu0 %v1741
        %1920 = vmatprep.subr.mxu0 %v1746
        %1921 = vmatpush1.msra.mxu0 %v1745
        %1922 = vmatprep.subr.mxu0 %v1750
        %1923 = vmatpush1.msra.mxu0 %v1749
        %1924 = vmatprep.subr.mxu0 %v1754
        %1925 = vmatpush1.msra.mxu0 %v1753
        %1926 = vmatprep.subr.mxu0 %v1758
        %1927 = vmatpush1.msra.mxu0 %v1757
        %1928 = vmatprep.subr.mxu0 %v1762
        %1929 = vmatpush1.msra.mxu0 %v1761
        %1930 = vmatprep.subr.mxu0 %v1766
        %1931 = vmatpush1.msra.mxu0 %v1765
        %1932 = vmatprep.subr.mxu0 %v1770
        %1933 = vmatpush1.msra.mxu0 %v1769
        %1934 = vmatprep.subr.mxu0 %v1774
        %1935 = vmatpush1.msra.mxu0 %v1773
        %1936 = vmatprep.subr.mxu0 %v1778
        %1937 = vmatpush1.msra.mxu0 %v1777
        %1938 = vmatprep.subr.mxu0 %v1782
        %1939 = vmatpush1.msra.mxu0 %v1781
        %1940 = vmatprep.mubr.f32.mxu0 %v1653
        %1941 = vmatmul.mubr.f32.gmra.mrb[0].mxu0 %v1647
        %v1942 = vpop.f32.mrb[0].mxu0
        %v1943 = vadd.f32 %v1796, %v1942
        %v1944 = vpop.f32.mrb[0].mxu0
        %v1945 = vadd.f32 %v1800, %v1944
        %1946 = vdwg.mxu0
        %v1947 = vxor.u32 %v1872, 2147483648
        %v1948 = vmul.f32 %v1947, 1.442695
        %v1949 = vpow.pop %v1948
        %v1950 = vadd.f32 %v1949, 1.0
        %v1951 = vrcp.pop %v1950
        %v1952 = vmul.f32 1.0, %v1951
        %v1953 = vxor.u32 %v1874, 2147483648
        %v1954 = vmul.f32 %v1953, 1.442695
        %v1955 = vpow.pop %v1954
        %v1956 = vadd.f32 %v1955, 1.0
        %v1957 = vrcp.pop %v1956
        %v1958 = vmul.f32 1.0, %v1957
        %v1959 = vtanh.pop %v1943
        %v1960 = vxor.u32 %v1945, 2147483648
        %v1961 = vmul.f32 %v1960, 1.442695
        %v1962 = vpow.pop %v1961
        %v1963 = vadd.f32 %v1962, 1.0
        %v1964 = vrcp.pop %v1963
        %v1965 = vmul.f32 1.0, %v1964
        %v1966 = vmul.f32 %v1958, %v1654
        %v1967 = vmul.f32 %v1952, %v1959
        %v1968 = vadd.f32 %v1966, %v1967
        %v1969 = vtanh.pop %v1968
        %v1970 = vmul.f32 %v1965, %v1969
        %v1971 = vld [vmem:[#allocation10] sm:$0xff]
        %v1972 = vld [vmem:[#allocation10 + $0x8] sm:$0xff]
        %v1973 = vld [vmem:[#allocation10 + $0x10] sm:$0xff]
        %v1974 = vld [vmem:[#allocation10 + $0x18] sm:$0xff]
        %v1975 = vld [vmem:[#allocation10 + $0x20] sm:$0xff]
        %v1976 = vld [vmem:[#allocation10 + $0x28] sm:$0xff]
        %v1977 = vld [vmem:[#allocation10 + $0x30] sm:$0xff]
        %v1978 = vld [vmem:[#allocation10 + $0x38] sm:$0xff]
        %v1979 = vld [vmem:[#allocation10 + $0x40] sm:$0xff]
        %v1980 = vld [vmem:[#allocation10 + $0x48] sm:$0xff]
        %v1981 = vld [vmem:[#allocation10 + $0x50] sm:$0xff]
        %v1982 = vld [vmem:[#allocation10 + $0x58] sm:$0xff]
        %v1983 = vld [vmem:[#allocation10 + $0x60] sm:$0xff]
        %v1984 = vld [vmem:[#allocation10 + $0x68] sm:$0xff]
        %v1985 = vld [vmem:[#allocation10 + $0x70] sm:$0xff]
        %v1986 = vld [vmem:[#allocation10 + $0x78] sm:$0xff]
        %v1987 = vld [vmem:[%s4] sm:$0x1]
        %v1989 = vlaneseq
        %v1990 = vshrl.u32 %v1989, 7
        %v1991 = vsub.s32 0, %v1990
        %v1992 = vrot.slane %v1987, %v1991
        %1994 = vmatprep.subr.mxu0 0.0
        %1995 = vmatpush1.msra.mxu0 %v1971
        %1996 = vmatprep.subr.mxu0 0.0
        %1997 = vmatpush1.msra.mxu0 %v1972
        %1998 = vmatprep.subr.mxu0 0.0
        %1999 = vmatpush1.msra.mxu0 %v1973
        %2000 = vmatprep.subr.mxu0 0.0
        %2001 = vmatpush1.msra.mxu0 %v1974
        %2002 = vmatprep.subr.mxu0 0.0
        %2003 = vmatpush1.msra.mxu0 %v1975
        %2004 = vmatprep.subr.mxu0 0.0
        %2005 = vmatpush1.msra.mxu0 %v1976
        %2006 = vmatprep.subr.mxu0 0.0
        %2007 = vmatpush1.msra.mxu0 %v1977
        %2008 = vmatprep.subr.mxu0 0.0
        %2009 = vmatpush1.msra.mxu0 %v1978
        %2010 = vmatprep.subr.mxu0 0.0
        %2011 = vmatpush1.msra.mxu0 %v1979
        %2012 = vmatprep.subr.mxu0 0.0
        %2013 = vmatpush1.msra.mxu0 %v1980
        %2014 = vmatprep.subr.mxu0 0.0
        %2015 = vmatpush1.msra.mxu0 %v1981
        %2016 = vmatprep.subr.mxu0 0.0
        %2017 = vmatpush1.msra.mxu0 %v1982
        %2018 = vmatprep.subr.mxu0 0.0
        %2019 = vmatpush1.msra.mxu0 %v1983
        %2020 = vmatprep.subr.mxu0 0.0
        %2021 = vmatpush1.msra.mxu0 %v1984
        %2022 = vmatprep.subr.mxu0 0.0
        %2023 = vmatpush1.msra.mxu0 %v1985
        %2024 = vmatprep.subr.mxu0 0.0
        %2025 = vmatpush1.msra.mxu0 %v1986
        %2026 = vmatprep.subr.mxu0 0.0
        %2027 = vmatpush1.msra.mxu0 0.0
        %2028 = vmatprep.subr.mxu0 0.0
        %2029 = vmatpush1.msra.mxu0 0.0
        %2030 = vmatprep.subr.mxu0 0.0
        %2031 = vmatpush1.msra.mxu0 0.0
        %2032 = vmatprep.subr.mxu0 0.0
        %2033 = vmatpush1.msra.mxu0 0.0
        %2034 = vmatprep.subr.mxu0 0.0
        %2035 = vmatpush1.msra.mxu0 0.0
        %2036 = vmatprep.subr.mxu0 0.0
        %2037 = vmatpush1.msra.mxu0 0.0
        %2038 = vmatprep.subr.mxu0 0.0
        %2039 = vmatpush1.msra.mxu0 0.0
        %2040 = vmatprep.subr.mxu0 0.0
        %2041 = vmatpush1.msra.mxu0 0.0
        %2042 = vmatprep.subr.mxu0 0.0
        %2043 = vmatpush1.msra.mxu0 0.0
        %2044 = vmatprep.subr.mxu0 0.0
        %2045 = vmatpush1.msra.mxu0 0.0
        %2046 = vmatprep.subr.mxu0 0.0
        %2047 = vmatpush1.msra.mxu0 0.0
        %2048 = vmatprep.subr.mxu0 0.0
        %2049 = vmatpush1.msra.mxu0 0.0
        %2050 = vmatprep.subr.mxu0 0.0
        %2051 = vmatpush1.msra.mxu0 0.0
        %2052 = vmatprep.subr.mxu0 0.0
        %2053 = vmatpush1.msra.mxu0 0.0
        %2054 = vmatprep.subr.mxu0 0.0
        %2055 = vmatpush1.msra.mxu0 0.0
        %2056 = vmatprep.subr.mxu0 0.0
        %2057 = vmatpush1.msra.mxu0 0.0
        %2058 = vmatprep.mubr.f32.mxu0 0.0
        %2059 = vmatmul.mubr.f32.gmra.mrb[0].mxu0 %v1970
        %v2060 = vpop.f32.mrb[0].mxu0
        %v2061 = vadd.f32 %v1992, %v2060
        %v2062 = vpop.f32.mrb[0].mxu0
        %2063 = vdwg.mxu0
        %2064 = vmax.xlane.f32.xlu0 %v2061
        %v2065 = vpop.xlane.xlu0 %2064
        %v2066 = vsub.f32 %v2061, %v2065
        %v2067 = vmul.f32 %v2066, 1.442695
        %v2068 = vpow.pop %v2067
        %2069 = vadd.xlane.f32.xlu0 %v2068
        %v2070 = vpop.xlane.xlu0 %2069
        %v2071 = vlog2.pop %v2070
        %v2072 = vmul.f32 %v2071, 0.6931472
        %v2073 = vadd.f32 %v2065, %v2072
        %v2074 = vsub.f32 %v2061, %v2073
        %s2075 = scalar_lea.vmem %s290, 24 [#allocation11]
        %2076 = vst [vmem:[%s2075] sm:$0xff] %v2074
        %vm2077 = vcmp.eq.f32.partialorder %v2061, %v2065
        %v2078 = vsel %vm2077, %v297, 128
        %v2079 = vand.u32 %v2078, 65535
        %v2080 = vshra.s32 %v2078, 16
        %v2081 = vcvt.s32.f32 %v2079
        %v2082 = vcvt.s32.f32 %v2080
        %2083 = vmin.xlane.f32.xlu0 %v2082
        %v2084 = vpop.xlane.xlu0 %2083
        %vm2085 = vcmp.eq.f32.partialorder %v2082, %v2084
        %v2086 = vsel %vm2085, %v2081, inf
        %2087 = vmin.xlane.f32.xlu0 %v2086
        %v2088 = vpop.xlane.xlu0 %2087
        %v2089 = vcvt.f32.s32 %v2088
        %v2090 = vcvt.f32.s32 %v2084
        %v2091 = vshll.u32 %v2090, 16
        %v2092 = vadd.s32 %v2091, %v2089
        %vm2093 = vcmp.eq.s32.totalorder %v297, %v2092
        %v2094 = vsel %vm2093, 1, 0
        %v2095 = vcvt.s32.f32 %v2094
        %s2096 = sadd.s32 %s309, 3
        %p2097 = scmp.lt.s32.totalorder %s2096, 10
        %s2098 = scalar_select %p2097, 1, 0
        %v2099 = vstv %s2098
        %vm2100 = vcmp.eq.s32.totalorder %v2099, 1
        %v2101 = vsel %vm2100, %v1970, %v1653
        %v2102 = vsel %vm2100, %v1968, %v1654
        %2103 = vst [vmem:[#allocation2] sm:$0xff] %v2101
        %2104 = vst [vmem:[#allocation3] sm:$0xff] %v2102
        %2105 = vst [vmem:[#allocation4] sm:$0xff] %v2095
        %p2106 = scmp.eq.s32.totalorder %s25, 2
        // Predicated region
        $region57: #{tpu_custom_call.1} parent=39 // pred_check
          %p2107 = pneg %p2106
        $region58: #{tpu_custom_call.1} parent=39 // pred_check_branch
          %2109 = sbr.rel (%p2107) target = $region60
        $region59: #{tpu_custom_call.1} parent=39 // pred_region
          %2110 = vst [vmem:[#allocation12] sm:$0xff] %v2101
          %2111 = vst [vmem:[#allocation14] sm:$0xff] %v2102
        $region60: #{tpu_custom_call.1} parent=39 // pred_fallthru
          _
        %s2112 = sand.u32 %s138, 1
        %s2113 = scalar_lea.sflag [#allocation7], %s2112
        %s2114 = sand.u32 %s138, 1
        %s2115 = smul.addr %s2114, 32
        %s2116 = scalar_lea.vmem [#allocation11], %s2115
        // Predicated region
        $region61: #{tpu_custom_call.1} parent=39 // pred_check
          %p2117 = pneg %p148
        $region62: #{tpu_custom_call.1} parent=39 // pred_check_branch
          %2119 = sbr.rel (%p2117) target = $region64
        $region63: #{tpu_custom_call.1} parent=39 // pred_region
          %s2120 = smul.u32 4, %s25
          %s2122 = ssub.s32 512, 512
          %2123 = vsyncadd %s2113, %s2122
          %s2124 = smul.addr %s2120, 128
          %s2125 = scalar_lea.hbm %s5, %s2124
          %s2126 = sshll.u32 %s2116, 4
          %s2127 = int_to_ptr.vmem [resolvable:$true] %s2126
          %2132 = dma.vmem_to_hbm [thread:$0]  %s2127, 512, %s2125, %s2113, 128, 128, 8
        $region64: #{tpu_custom_call.1} parent=39 // pred_fallthru
          _
        // Predicated region
        $region65: #{tpu_custom_call.1} parent=39 // pred_check
          %p2133 = pneg %p169
        $region66: #{tpu_custom_call.1} parent=39 // pred_check_branch
          %2135 = sbr.rel (%p2133) target = $region68
        $region67: #{tpu_custom_call.1} parent=39 // pred_region
          %s2137 = ssub.s32 128, 128
          %2138 = vsyncadd [#allocation13], %s2137
          %s2140 = sshll.u32 [#allocation12], 4
          %s2141 = int_to_ptr.vmem [resolvable:$true] %s2140
          %2143 = dma.vmem_to_hbm [thread:$0]  %s2141, 128, %s6, [#allocation13]
        $region68: #{tpu_custom_call.1} parent=39 // pred_fallthru
          _
        // Predicated region
        $region69: #{tpu_custom_call.1} parent=39 // pred_check
          %p2144 = pneg %p190
        $region70: #{tpu_custom_call.1} parent=39 // pred_check_branch
          %2146 = sbr.rel (%p2144) target = $region72
        $region71: #{tpu_custom_call.1} parent=39 // pred_region
          %s2148 = ssub.s32 128, 128
          %2149 = vsyncadd [#allocation13], %s2148
          %s2151 = sshll.u32 [#allocation14], 4
          %s2152 = int_to_ptr.vmem [resolvable:$true] %s2151
          %2154 = dma.vmem_to_hbm [thread:$0]  %s2152, 128, %s7, [#allocation13]
        $region72: #{tpu_custom_call.1} parent=39 // pred_fallthru
          _
        // Predicated region
        $region73: #{tpu_custom_call.1} parent=39 // pred_check
          %p2155 = pneg %p169
        $region74: #{tpu_custom_call.1} parent=39 // pred_check_branch
          %2157 = sbr.rel (%p2155) target = $region76
        $region75: #{tpu_custom_call.1} parent=39 // pred_region
          %2158 = dma.done [#allocation13], 128
        $region76: #{tpu_custom_call.1} parent=39 // pred_fallthru
          _
        // Predicated region
        $region77: #{tpu_custom_call.1} parent=39 // pred_check
          %p2159 = pneg %p190
        $region78: #{tpu_custom_call.1} parent=39 // pred_check_branch
          %2161 = sbr.rel (%p2159) target = $region80
        $region79: #{tpu_custom_call.1} parent=39 // pred_region
          %2162 = dma.done [#allocation13], 128
        $region80: #{tpu_custom_call.1} parent=39 // pred_fallthru
          _
      $region40: #{tpu_custom_call.1} parent=5 // pred_fallthru
        _
      %p2163 = scmp.le.s32.totalorder 2, %s20
      // Predicated region
      $region81: #{tpu_custom_call.1} parent=5 // pred_check
        %p2164 = pneg %p2163
      $region82: #{tpu_custom_call.1} parent=5 // pred_check_branch
        %2166 = sbr.rel (%p2164) target = $region84
      $region83: #{tpu_custom_call.1} parent=5 // pred_region
        %s2167 = ssub.s32 %s20, 2
        // Predicated region
        $region85: #{tpu_custom_call.1} parent=83 // pred_check
          %p2168 = pneg %p154
        $region86: #{tpu_custom_call.1} parent=83 // pred_check_branch
          %2170 = sbr.rel (%p2168) target = $region88
        $region87: #{tpu_custom_call.1} parent=83 // pred_region
          %s2171 = sand.u32 %s139, 1
          %s2172 = scalar_lea.sflag [#allocation7], %s2171
          %s2173 = sand.u32 %s139, 1
          %s2174 = smul.addr %s2173, 32
          %s2175 = scalar_lea.vmem [#allocation11], %s2174
          %2176 = dma.done %s2172, 512
        $region88: #{tpu_custom_call.1} parent=83 // pred_fallthru
          _
      $region84: #{tpu_custom_call.1} parent=5 // pred_fallthru
        _
    $region6: #{tpu_custom_call.1} parent=1 // loop_footer
      %s24 = sadd.s32 1, %s20
    $region7: #{tpu_custom_call.1} parent=1 // loop_footer_branch
      %19 = sbr.rel target = $region3
    $region8: #{tpu_custom_call.1} parent=1 // loop_exit
      _
    %2177 = vsyncpa [#allocation6], 1
    %s2178 = scalar_lea.sflag [#allocation6], 1
    %2179 = vsyncpa %s2178, 1
    %2180 = vsyncpa [#allocation9], 1
    %2181 = vsyncpa [#allocation7], 1
    %s2182 = scalar_lea.sflag [#allocation7], 1
    %2183 = vsyncpa %s2182, 1
    %2184 = vsyncpa [#allocation13], 1

</llo_original>
